<compile_context>
chip_gen: v7x
topology: tpu7x:2x2x1
jax: 0.10.0
libtpu: 0.0.40
codegen_flags: <defaults>
</compile_context>

<pallas_src>
import functools

import jax
import jax.numpy as jnp
import numpy as np
from jax import lax
from jax.experimental import pallas as pl
from jax.experimental.pallas import tpu as pltpu

BN_EPS = 1e-5    # PyTorch BatchNorm2d default


# ---------------------------------------------------------------------------
# Shared tap enumeration (kernel offsets and wrapper masks must agree on order)
# ---------------------------------------------------------------------------
def _taps(k, dil, p):
    """(dy, dx) offsets of a k x k conv with dilation `dil`, padding `p` (row-major)."""
    return [(ky * dil - p, kx * dil - p) for ky in range(k) for kx in range(k)]


def _tap_mask(taps, cin, H, W):
    """Combined (vertical & horizontal) validity mask per tap, repeated over `cin`
    channel rows: shape (len(taps)*cin, H*W), f32 0/1. Static — built with numpy."""
    idx = np.arange(H * W)
    row, col = idx // W, idx % W
    rows = [np.broadcast_to((row + dy >= 0) & (row + dy < H)
                            & (col + dx >= 0) & (col + dx < W), (cin, H * W))
            for dy, dx in taps]
    return jnp.asarray(np.concatenate(rows, axis=0).astype(np.float32))


# ---------------------------------------------------------------------------
# Pallas kernel: one image (Cp, H*W) per grid step
# ---------------------------------------------------------------------------
def mse_kernel(x_ref, w12_ref, b12_ref, wa_ref, ba_ref, wc_ref, bc_ref,
               m25_ref, m9_ref, m27_ref, alpha_ref, o_ref, *, H, W):
    HW = H * W
    f32 = jnp.float32

    xi = x_ref[...]                       # (Cp, HW)  one image, flat row-major, f32
    alpha = alpha_ref[0]                  # PReLU scalar (SMEM)

    def patches(src, k, dil, p):
        # im2col via lane rolls of the un-padded slab (XLU; masks applied by caller).
        pieces = []
        for dy, dx in _taps(k, dil, p):
            off = dy * W + dx
            pieces.append(src if off == 0
                          else pltpu.roll(src, shift=(-off) % HW, axis=1))
        return jnp.concatenate(pieces, axis=0)

    # branches 1 & 2 (3x3-embedded-in-5x5 + 5x5): one fused matmul, K = 25*Cp
    p25 = patches(xi, 5, 1, 2) * m25_ref[...]                            # (25Cp, HW)
    o12 = jnp.maximum(
        jnp.dot(w12_ref[...], p25, preferred_element_type=f32) + b12_ref[...], 0.0)

    # branch 3: 3x3 dilation-3 conv + PReLU, K = 9*Cp
    p9 = patches(xi, 3, 3, 3) * m9_ref[...]                              # (9Cp, HW)
    a3 = jnp.dot(wa_ref[...], p9, preferred_element_type=f32) + ba_ref[...]
    o3 = jnp.where(a3 > 0, a3, alpha * a3)                               # (Cp, HW)

    # conv_cat over cat(out1, out2, out3) + residual + relu, K = 27*Cp
    cat = jnp.concatenate([o12, o3], axis=0)                             # (3Cp, HW)
    p27 = patches(cat, 3, 1, 1) * m27_ref[...]                           # (27Cp, HW)
    oc = jnp.dot(wc_ref[...], p27, preferred_element_type=f32) + bc_ref[...] + xi
    o_ref[...] = jnp.maximum(oc, 0.0)                                    # direct store


# ---------------------------------------------------------------------------
# Wrapper: BN folding + channel padding + weight reshaping + pallas_call
# ---------------------------------------------------------------------------
def _fold_bn(w, gamma, beta, mean, var, conv_bias=None):
    """Fold inference-mode BN into an HWIO conv weight + per-channel bias."""
    scale = gamma / jnp.sqrt(var + BN_EPS)                      # (Cout,)
    wf = (w * scale).astype(jnp.float32)                        # broadcast over Cout
    bias = beta - mean * scale
    if conv_bias is not None:
        bias = bias + conv_bias * scale
    return wf, bias.astype(jnp.float32)


def mse_forward(x, P):
    """x: (N, C, H, W) float32 (NCHW, PyTorch layout)."""
    N, C, H, W = x.shape
    HW = H * W
    Cp = -(-C // 8) * 8                 # sublane-pad channels to a multiple of 8

    # ---- fold BN into conv weights / biases ----
    w1f, b1f = _fold_bn(P["w1"], P["bn1_g"], P["bn1_b"], P["bn1_m"], P["bn1_v"])
    w3f, b3f = _fold_bn(P["w3"], P["bn3_g"], P["bn3_b"], P["bn3_m"], P["bn3_v"])
    waf, baf = _fold_bn(P["wa"], P["bna_g"], P["bna_b"], P["bna_m"], P["bna_v"],
                        conv_bias=P["ba"])
    wcf, bcf = _fold_bn(P["wcat"], P["bnc_g"], P["bnc_b"], P["bnc_m"], P["bnc_v"])

    # ---- im2col weights, channel-padded to Cp; branches 1&2 fused in one matrix ----
    w1e = jnp.zeros((5, 5, Cp, Cp), jnp.float32).at[1:4, 1:4, :C, :C].set(w1f)
    w3e = jnp.zeros((5, 5, Cp, Cp), jnp.float32).at[:, :, :C, :C].set(w3f)
    w12 = jnp.concatenate([w1e.reshape(25 * Cp, Cp).T,
                           w3e.reshape(25 * Cp, Cp).T], axis=0)          # (2Cp, 25Cp)
    b12 = (jnp.zeros((2 * Cp, 1), jnp.float32)
           .at[:C, 0].set(b1f).at[Cp:Cp + C, 0].set(b3f))

    wae = jnp.zeros((3, 3, Cp, Cp), jnp.float32).at[:, :, :C, :C].set(waf)
    wa = wae.reshape(9 * Cp, Cp).T                                       # (Cp, 9Cp)
    ba = jnp.zeros((Cp, 1), jnp.float32).at[:C, 0].set(baf)

    # conv_cat: scatter each C-wide input-channel group into its Cp-wide padded slot
    wce = jnp.zeros((3, 3, 3 * Cp, Cp), jnp.float32)
    for g in range(3):
        wce = wce.at[:, :, g * Cp:g * Cp + C, :C].set(wcf[:, :, g * C:(g + 1) * C, :])
    wc = wce.reshape(27 * Cp, Cp).T                                      # (Cp, 27Cp)
    bc = jnp.zeros((Cp, 1), jnp.float32).at[:C, 0].set(bcf)

    alpha = jnp.asarray(P["alpha"], jnp.float32).reshape((1,))

    # ---- batch-invariant zero-padding masks (static; one multiply per patch matrix) ----
    m25 = _tap_mask(_taps(5, 1, 2), Cp, H, W)          # (25*Cp, HW)
    m9 = _tap_mask(_taps(3, 3, 3), Cp, H, W)           # (9*Cp, HW)
    m27 = _tap_mask(_taps(3, 1, 1), 3 * Cp, H, W)      # (27*Cp, HW)

    # ---- lane-dense, channel-padded input: (N*Cp, HW) ----
    xp = jnp.zeros((N, Cp, HW), jnp.float32).at[:, :C, :].set(
        x.astype(jnp.float32).reshape(N, C, HW))
    x2d = xp.reshape(N * Cp, HW)

    resident = lambda a: pl.BlockSpec(a.shape, lambda n: (0, 0))  # stays in VMEM

    out2d = pl.pallas_call(
        functools.partial(mse_kernel, H=H, W=W),
        out_shape=jax.ShapeDtypeStruct((N * Cp, HW), jnp.float32),
        grid=(N,),                                      # one image per grid step
        in_specs=[pl.BlockSpec((Cp, HW), lambda n: (n, 0)),
                  resident(w12), resident(b12),
                  resident(wa), resident(ba),
                  resident(wc), resident(bc),
                  resident(m25), resident(m9), resident(m27),
                  pl.BlockSpec(memory_space=pltpu.MemorySpace.SMEM)],   # alpha
        out_specs=pl.BlockSpec((Cp, HW), lambda n: (n, 0)),
        compiler_params=pltpu.CompilerParams(
            dimension_semantics=("parallel",)),
    )(x2d, w12, b12, wa, ba, wc, bc, m25, m9, m27, alpha)

    return out2d.reshape(N, Cp, H, W)[:, :C].astype(x.dtype)


# ---------------------------------------------------------------------------
# Deterministic parameter init + pure-JAX reference (NCHW)
# ---------------------------------------------------------------------------
def init_params(C, key):
    ks = jax.random.split(key, 10)
    w = lambda k, s: (0.1 * jax.random.normal(k, s)).astype(jnp.float32)

    def bn(k):
        k1, k2, k3, k4 = jax.random.split(k, 4)
        return ((1.0 + 0.1 * jax.random.normal(k1, (C,))).astype(jnp.float32),
                (0.1 * jax.random.normal(k2, (C,))).astype(jnp.float32),
                (0.1 * jax.random.normal(k3, (C,))).astype(jnp.float32),
                (0.5 + jnp.abs(jax.random.normal(k4, (C,)))).astype(jnp.float32))

    bn1 = bn(ks[5]); bn3 = bn(ks[6]); bna = bn(ks[7]); bnc = bn(ks[8])
    return dict(
        w1=w(ks[0], (3, 3, C, C)),
        w3=w(ks[1], (5, 5, C, C)),
        wa=w(ks[2], (3, 3, C, C)), ba=w(ks[3], (C,)),
        wcat=w(ks[4], (3, 3, 3 * C, C)),
        bn1_g=bn1[0], bn1_b=bn1[1], bn1_m=bn1[2], bn1_v=bn1[3],
        bn3_g=bn3[0], bn3_b=bn3[1], bn3_m=bn3[2], bn3_v=bn3[3],
        bna_g=bna[0], bna_b=bna[1], bna_m=bna[2], bna_v=bna[3],
        bnc_g=bnc[0], bnc_b=bnc[1], bnc_m=bnc[2], bnc_v=bnc[3],
        alpha=jnp.float32(0.25),                                 # nn.PReLU() default
    )


def mse_reference(x, P):
    dn = ("NCHW", "HWIO", "NCHW")
    hi = lax.Precision.HIGHEST

    def conv(v, w, pad, dil=1):
        return lax.conv_general_dilated(
            v, w, window_strides=(1, 1), padding=((pad, pad), (pad, pad)),
            rhs_dilation=(dil, dil), dimension_numbers=dn, precision=hi)

    def bn(y, g, b, m, v):
        s = (1, -1, 1, 1)
        return (g.reshape(s) * (y - m.reshape(s)) / jnp.sqrt(v.reshape(s) + BN_EPS)
                + b.reshape(s))

    out1 = jax.nn.relu(bn(conv(x, P["w1"], 1),
                          P["bn1_g"], P["bn1_b"], P["bn1_m"], P["bn1_v"]))
    out2 = jax.nn.relu(bn(conv(x, P["w3"], 2),
                          P["bn3_g"], P["bn3_b"], P["bn3_m"], P["bn3_v"]))
    a3 = bn(conv(x, P["wa"], 3, dil=3) + P["ba"].reshape(1, -1, 1, 1),
            P["bna_g"], P["bna_b"], P["bna_m"], P["bna_v"])
    out3 = jnp.where(a3 > 0, a3, P["alpha"] * a3)
    cat = jnp.concatenate([out1, out2, out3], axis=1)
    out = bn(conv(cat, P["wcat"], 1),
             P["bnc_g"], P["bnc_b"], P["bnc_m"], P["bnc_v"])
    return jax.nn.relu(out + x)


if __name__ == "__main__":
    N, C, H, W = 2, 4, 16, 16          # inplanes == planes (required by conv_cat)
    key = jax.random.PRNGKey(0)
    kx, kp = jax.random.split(key)
    x = jax.random.normal(kx, (N, C, H, W), jnp.float32)        # NCHW, PyTorch layout

    params = init_params(C, kp)
    out = jax.jit(mse_forward)(x, params)
    out = jax.block_until_ready(out)

    ref = mse_reference(x, params)
    assert out.shape == (N, C, H, W)
    # Deliberately slightly looser than pure f32: kernel matmuls use the MXU's default
    # f32 path while the reference pins lax.Precision.HIGHEST.
    np.testing.assert_allclose(np.asarray(out), np.asarray(ref), rtol=2e-4, atol=2e-4)
    print("KERNEL_OK")
</pallas_src>

<mosaic_0001>
module attributes {stable_mosaic.version = 11 : i64} {
  func.func @mse_kernel(%arg0: i32, %arg1: memref<8x256xf32, #tpu.memory_space<vmem>>, %arg2: memref<16x200xf32, #tpu.memory_space<vmem>>, %arg3: memref<16x1xf32, #tpu.memory_space<vmem>>, %arg4: memref<8x72xf32, #tpu.memory_space<vmem>>, %arg5: memref<8x1xf32, #tpu.memory_space<vmem>>, %arg6: memref<8x216xf32, #tpu.memory_space<vmem>>, %arg7: memref<8x1xf32, #tpu.memory_space<vmem>>, %arg8: memref<200x256xf32, #tpu.memory_space<vmem>>, %arg9: memref<72x256xf32, #tpu.memory_space<vmem>>, %arg10: memref<216x256xf32, #tpu.memory_space<vmem>>, %arg11: memref<1xf32, #tpu.memory_space<smem>>, %arg12: memref<8x256xf32, #tpu.memory_space<vmem>>) attributes {dimension_semantics = [#tpu.dimension_semantics<parallel>], iteration_bounds = array<i64: 2>, scalar_prefetch = 0 : i64, scratch_operands = 0 : i64, tpu.core_type = #tpu.core_type<tc>, window_params = [{transform_indices = @transform_0, window_bounds = array<i64: 8, 256>}, {pipeline_mode = #tpu.pipeline_mode<synchronous>, transform_indices = @transform_1, window_bounds = array<i64: 16, 200>}, {pipeline_mode = #tpu.pipeline_mode<synchronous>, transform_indices = @transform_2, window_bounds = array<i64: 16, 1>}, {pipeline_mode = #tpu.pipeline_mode<synchronous>, transform_indices = @transform_3, window_bounds = array<i64: 8, 72>}, {pipeline_mode = #tpu.pipeline_mode<synchronous>, transform_indices = @transform_4, window_bounds = array<i64: 8, 1>}, {pipeline_mode = #tpu.pipeline_mode<synchronous>, transform_indices = @transform_5, window_bounds = array<i64: 8, 216>}, {pipeline_mode = #tpu.pipeline_mode<synchronous>, transform_indices = @transform_6, window_bounds = array<i64: 8, 1>}, {pipeline_mode = #tpu.pipeline_mode<synchronous>, transform_indices = @transform_7, window_bounds = array<i64: 200, 256>}, {pipeline_mode = #tpu.pipeline_mode<synchronous>, transform_indices = @transform_8, window_bounds = array<i64: 72, 256>}, {pipeline_mode = #tpu.pipeline_mode<synchronous>, transform_indices = @transform_9, window_bounds = array<i64: 216, 256>}, {transform_indices = @transform_10, window_bounds = array<i64: 1>}, {transform_indices = @transform_11, window_bounds = array<i64: 8, 256>}]} {
    %c0 = arith.constant 0 : index
    %c0_0 = arith.constant 0 : index
    %0 = vector.load %arg1[%c0, %c0_0] : memref<8x256xf32, #tpu.memory_space<vmem>>, vector<8x256xf32>
    %c0_1 = arith.constant 0 : index
    %1 = memref.load %arg11[%c0_1] : memref<1xf32, #tpu.memory_space<smem>>
    %c34_i32 = arith.constant 34 : i32
    %2 = tpu.dynamic_rotate %0 by %c34_i32 dim 1 : vector<8x256xf32>, i32 -> vector<8x256xf32>
    %c33_i32 = arith.constant 33 : i32
    %3 = tpu.dynamic_rotate %0 by %c33_i32 dim 1 : vector<8x256xf32>, i32 -> vector<8x256xf32>
    %c32_i32 = arith.constant 32 : i32
    %4 = tpu.dynamic_rotate %0 by %c32_i32 dim 1 : vector<8x256xf32>, i32 -> vector<8x256xf32>
    %c31_i32 = arith.constant 31 : i32
    %5 = tpu.dynamic_rotate %0 by %c31_i32 dim 1 : vector<8x256xf32>, i32 -> vector<8x256xf32>
    %c30_i32 = arith.constant 30 : i32
    %6 = tpu.dynamic_rotate %0 by %c30_i32 dim 1 : vector<8x256xf32>, i32 -> vector<8x256xf32>
    %c18_i32 = arith.constant 18 : i32
    %7 = tpu.dynamic_rotate %0 by %c18_i32 dim 1 : vector<8x256xf32>, i32 -> vector<8x256xf32>
    %c17_i32 = arith.constant 17 : i32
    %8 = tpu.dynamic_rotate %0 by %c17_i32 dim 1 : vector<8x256xf32>, i32 -> vector<8x256xf32>
    %c16_i32 = arith.constant 16 : i32
    %9 = tpu.dynamic_rotate %0 by %c16_i32 dim 1 : vector<8x256xf32>, i32 -> vector<8x256xf32>
    %c15_i32 = arith.constant 15 : i32
    %10 = tpu.dynamic_rotate %0 by %c15_i32 dim 1 : vector<8x256xf32>, i32 -> vector<8x256xf32>
    %c14_i32 = arith.constant 14 : i32
    %11 = tpu.dynamic_rotate %0 by %c14_i32 dim 1 : vector<8x256xf32>, i32 -> vector<8x256xf32>
    %c2_i32 = arith.constant 2 : i32
    %12 = tpu.dynamic_rotate %0 by %c2_i32 dim 1 : vector<8x256xf32>, i32 -> vector<8x256xf32>
    %c1_i32 = arith.constant 1 : i32
    %13 = tpu.dynamic_rotate %0 by %c1_i32 dim 1 : vector<8x256xf32>, i32 -> vector<8x256xf32>
    %c255_i32 = arith.constant 255 : i32
    %14 = tpu.dynamic_rotate %0 by %c255_i32 dim 1 : vector<8x256xf32>, i32 -> vector<8x256xf32>
    %c254_i32 = arith.constant 254 : i32
    %15 = tpu.dynamic_rotate %0 by %c254_i32 dim 1 : vector<8x256xf32>, i32 -> vector<8x256xf32>
    %c242_i32 = arith.constant 242 : i32
    %16 = tpu.dynamic_rotate %0 by %c242_i32 dim 1 : vector<8x256xf32>, i32 -> vector<8x256xf32>
    %c241_i32 = arith.constant 241 : i32
    %17 = tpu.dynamic_rotate %0 by %c241_i32 dim 1 : vector<8x256xf32>, i32 -> vector<8x256xf32>
    %c240_i32 = arith.constant 240 : i32
    %18 = tpu.dynamic_rotate %0 by %c240_i32 dim 1 : vector<8x256xf32>, i32 -> vector<8x256xf32>
    %c239_i32 = arith.constant 239 : i32
    %19 = tpu.dynamic_rotate %0 by %c239_i32 dim 1 : vector<8x256xf32>, i32 -> vector<8x256xf32>
    %c238_i32 = arith.constant 238 : i32
    %20 = tpu.dynamic_rotate %0 by %c238_i32 dim 1 : vector<8x256xf32>, i32 -> vector<8x256xf32>
    %c226_i32 = arith.constant 226 : i32
    %21 = tpu.dynamic_rotate %0 by %c226_i32 dim 1 : vector<8x256xf32>, i32 -> vector<8x256xf32>
    %c225_i32 = arith.constant 225 : i32
    %22 = tpu.dynamic_rotate %0 by %c225_i32 dim 1 : vector<8x256xf32>, i32 -> vector<8x256xf32>
    %c224_i32 = arith.constant 224 : i32
    %23 = tpu.dynamic_rotate %0 by %c224_i32 dim 1 : vector<8x256xf32>, i32 -> vector<8x256xf32>
    %c223_i32 = arith.constant 223 : i32
    %24 = tpu.dynamic_rotate %0 by %c223_i32 dim 1 : vector<8x256xf32>, i32 -> vector<8x256xf32>
    %c222_i32 = arith.constant 222 : i32
    %25 = tpu.dynamic_rotate %0 by %c222_i32 dim 1 : vector<8x256xf32>, i32 -> vector<8x256xf32>
    %26 = tpu.concatenate %2, %3, %4, %5, %6, %7, %8, %9, %10, %11, %12, %13, %0, %14, %15, %16 in 0 : vector<8x256xf32>, vector<8x256xf32>, vector<8x256xf32>, vector<8x256xf32>, vector<8x256xf32>, vector<8x256xf32>, vector<8x256xf32>, vector<8x256xf32>, vector<8x256xf32>, vector<8x256xf32>, vector<8x256xf32>, vector<8x256xf32>, vector<8x256xf32>, vector<8x256xf32>, vector<8x256xf32>, vector<8x256xf32> -> vector<128x256xf32>
    %27 = tpu.concatenate %17, %18, %19, %20, %21, %22, %23, %24, %25 in 0 : vector<8x256xf32>, vector<8x256xf32>, vector<8x256xf32>, vector<8x256xf32>, vector<8x256xf32>, vector<8x256xf32>, vector<8x256xf32>, vector<8x256xf32>, vector<8x256xf32> -> vector<72x256xf32>
    %28 = tpu.concatenate %26, %27 in 0 : vector<128x256xf32>, vector<72x256xf32> -> vector<200x256xf32>
    %c0_2 = arith.constant 0 : index
    %c0_3 = arith.constant 0 : index
    %29 = vector.load %arg8[%c0_2, %c0_3] : memref<200x256xf32, #tpu.memory_space<vmem>>, vector<200x256xf32>
    %30 = arith.mulf %28, %29 : vector<200x256xf32>
    %c0_4 = arith.constant 0 : index
    %c0_5 = arith.constant 0 : index
    %31 = vector.load %arg2[%c0_4, %c0_5] : memref<16x200xf32, #tpu.memory_space<vmem>>, vector<16x200xf32>
    %cst = arith.constant dense<0.000000e+00> : vector<16x256xf32>
    %32 = tpu.matmul %31, %30, %cst {dimension_numbers = #tpu.dot_dimension_numbers<[1], [0], [0], [1], [0, 0, 1, 1], [], []>} : vector<16x200xf32>, vector<200x256xf32>, vector<16x256xf32> -> vector<16x256xf32>
    %c0_6 = arith.constant 0 : index
    %c0_7 = arith.constant 0 : index
    %33 = vector.load %arg3[%c0_6, %c0_7] : memref<16x1xf32, #tpu.memory_space<vmem>>, vector<16x1xf32>
    %34 = vector.broadcast %33 : vector<16x1xf32> to vector<16x256xf32>
    %35 = arith.addf %32, %34 : vector<16x256xf32>
    %cst_8 = arith.constant 0.000000e+00 : f32
    %36 = vector.broadcast %cst_8 : f32 to vector<16x256xf32>
    %37 = arith.maximumf %35, %36 : vector<16x256xf32>
    %c51_i32 = arith.constant 51 : i32
    %38 = tpu.dynamic_rotate %0 by %c51_i32 dim 1 : vector<8x256xf32>, i32 -> vector<8x256xf32>
    %c48_i32 = arith.constant 48 : i32
    %39 = tpu.dynamic_rotate %0 by %c48_i32 dim 1 : vector<8x256xf32>, i32 -> vector<8x256xf32>
    %c45_i32 = arith.constant 45 : i32
    %40 = tpu.dynamic_rotate %0 by %c45_i32 dim 1 : vector<8x256xf32>, i32 -> vector<8x256xf32>
    %c3_i32 = arith.constant 3 : i32
    %41 = tpu.dynamic_rotate %0 by %c3_i32 dim 1 : vector<8x256xf32>, i32 -> vector<8x256xf32>
    %c253_i32 = arith.constant 253 : i32
    %42 = tpu.dynamic_rotate %0 by %c253_i32 dim 1 : vector<8x256xf32>, i32 -> vector<8x256xf32>
    %c211_i32 = arith.constant 211 : i32
    %43 = tpu.dynamic_rotate %0 by %c211_i32 dim 1 : vector<8x256xf32>, i32 -> vector<8x256xf32>
    %c208_i32 = arith.constant 208 : i32
    %44 = tpu.dynamic_rotate %0 by %c208_i32 dim 1 : vector<8x256xf32>, i32 -> vector<8x256xf32>
    %c205_i32 = arith.constant 205 : i32
    %45 = tpu.dynamic_rotate %0 by %c205_i32 dim 1 : vector<8x256xf32>, i32 -> vector<8x256xf32>
    %46 = tpu.concatenate %38, %39, %40, %41, %0, %42, %43, %44, %45 in 0 : vector<8x256xf32>, vector<8x256xf32>, vector<8x256xf32>, vector<8x256xf32>, vector<8x256xf32>, vector<8x256xf32>, vector<8x256xf32>, vector<8x256xf32>, vector<8x256xf32> -> vector<72x256xf32>
    %c0_9 = arith.constant 0 : index
    %c0_10 = arith.constant 0 : index
    %47 = vector.load %arg9[%c0_9, %c0_10] : memref<72x256xf32, #tpu.memory_space<vmem>>, vector<72x256xf32>
    %48 = arith.mulf %46, %47 : vector<72x256xf32>
    %c0_11 = arith.constant 0 : index
    %c0_12 = arith.constant 0 : index
    %49 = vector.load %arg4[%c0_11, %c0_12] : memref<8x72xf32, #tpu.memory_space<vmem>>, vector<8x72xf32>
    %cst_13 = arith.constant dense<0.000000e+00> : vector<8x256xf32>
    %50 = tpu.matmul %49, %48, %cst_13 {dimension_numbers = #tpu.dot_dimension_numbers<[1], [0], [0], [1], [0, 0, 1, 1], [], []>} : vector<8x72xf32>, vector<72x256xf32>, vector<8x256xf32> -> vector<8x256xf32>
    %c0_14 = arith.constant 0 : index
    %c0_15 = arith.constant 0 : index
    %51 = vector.load %arg5[%c0_14, %c0_15] : memref<8x1xf32, #tpu.memory_space<vmem>>, vector<8x1xf32>
    %52 = vector.broadcast %51 : vector<8x1xf32> to vector<8x256xf32>
    %53 = arith.addf %50, %52 : vector<8x256xf32>
    %cst_16 = arith.constant 0.000000e+00 : f32
    %54 = vector.broadcast %cst_16 : f32 to vector<8x256xf32>
    %55 = arith.cmpf ogt, %53, %54 : vector<8x256xf32>
    %56 = vector.broadcast %1 : f32 to vector<8x256xf32>
    %57 = arith.mulf %56, %53 : vector<8x256xf32>
    %58 = arith.select %55, %53, %57 : vector<8x256xi1>, vector<8x256xf32>
    %59 = tpu.concatenate %37, %58 in 0 : vector<16x256xf32>, vector<8x256xf32> -> vector<24x256xf32>
    %c17_i32_17 = arith.constant 17 : i32
    %60 = tpu.dynamic_rotate %59 by %c17_i32_17 dim 1 : vector<24x256xf32>, i32 -> vector<24x256xf32>
    %c16_i32_18 = arith.constant 16 : i32
    %61 = tpu.dynamic_rotate %59 by %c16_i32_18 dim 1 : vector<24x256xf32>, i32 -> vector<24x256xf32>
    %c15_i32_19 = arith.constant 15 : i32
    %62 = tpu.dynamic_rotate %59 by %c15_i32_19 dim 1 : vector<24x256xf32>, i32 -> vector<24x256xf32>
    %c1_i32_20 = arith.constant 1 : i32
    %63 = tpu.dynamic_rotate %59 by %c1_i32_20 dim 1 : vector<24x256xf32>, i32 -> vector<24x256xf32>
    %c255_i32_21 = arith.constant 255 : i32
    %64 = tpu.dynamic_rotate %59 by %c255_i32_21 dim 1 : vector<24x256xf32>, i32 -> vector<24x256xf32>
    %c241_i32_22 = arith.constant 241 : i32
    %65 = tpu.dynamic_rotate %59 by %c241_i32_22 dim 1 : vector<24x256xf32>, i32 -> vector<24x256xf32>
    %c240_i32_23 = arith.constant 240 : i32
    %66 = tpu.dynamic_rotate %59 by %c240_i32_23 dim 1 : vector<24x256xf32>, i32 -> vector<24x256xf32>
    %c239_i32_24 = arith.constant 239 : i32
    %67 = tpu.dynamic_rotate %59 by %c239_i32_24 dim 1 : vector<24x256xf32>, i32 -> vector<24x256xf32>
    %68 = tpu.concatenate %60, %61, %62, %63, %59, %64, %65, %66, %67 in 0 : vector<24x256xf32>, vector<24x256xf32>, vector<24x256xf32>, vector<24x256xf32>, vector<24x256xf32>, vector<24x256xf32>, vector<24x256xf32>, vector<24x256xf32>, vector<24x256xf32> -> vector<216x256xf32>
    %c0_25 = arith.constant 0 : index
    %c0_26 = arith.constant 0 : index
    %69 = vector.load %arg10[%c0_25, %c0_26] : memref<216x256xf32, #tpu.memory_space<vmem>>, vector<216x256xf32>
    %70 = arith.mulf %68, %69 : vector<216x256xf32>
    %c0_27 = arith.constant 0 : index
    %c0_28 = arith.constant 0 : index
    %71 = vector.load %arg6[%c0_27, %c0_28] : memref<8x216xf32, #tpu.memory_space<vmem>>, vector<8x216xf32>
    %cst_29 = arith.constant dense<0.000000e+00> : vector<8x256xf32>
    %72 = tpu.matmul %71, %70, %cst_29 {dimension_numbers = #tpu.dot_dimension_numbers<[1], [0], [0], [1], [0, 0, 1, 1], [], []>} : vector<8x216xf32>, vector<216x256xf32>, vector<8x256xf32> -> vector<8x256xf32>
    %c0_30 = arith.constant 0 : index
    %c0_31 = arith.constant 0 : index
    %73 = vector.load %arg7[%c0_30, %c0_31] : memref<8x1xf32, #tpu.memory_space<vmem>>, vector<8x1xf32>
    %74 = vector.broadcast %73 : vector<8x1xf32> to vector<8x256xf32>
    %75 = arith.addf %72, %74 : vector<8x256xf32>
    %76 = arith.addf %75, %0 : vector<8x256xf32>
    %cst_32 = arith.constant 0.000000e+00 : f32
    %77 = vector.broadcast %cst_32 : f32 to vector<8x256xf32>
    %78 = arith.maximumf %76, %77 : vector<8x256xf32>
    %c0_33 = arith.constant 0 : index
    %c0_34 = arith.constant 0 : index
    %79 = vector.load %arg12[%c0_33, %c0_34] : memref<8x256xf32, #tpu.memory_space<vmem>>, vector<8x256xf32>
    tpu.vector_store %arg12[%c0_33, %c0_34], %78 {strides = array<i32>} : memref<8x256xf32, #tpu.memory_space<vmem>>, vector<8x256xf32>,
    return
  }
  func.func @transform_0(%arg0: i32) -> (i32, i32) {
    %c0_i32 = arith.constant 0 : i32
    %c0_i32_0 = arith.constant 0 : i32
    return %arg0, %c0_i32 : i32, i32
  }
  func.func @transform_1(%arg0: i32) -> (i32, i32) {
    %c0_i32 = arith.constant 0 : i32
    %c0_i32_0 = arith.constant 0 : i32
    %c0_i32_1 = arith.constant 0 : i32
    return %c0_i32, %c0_i32_0 : i32, i32
  }
  func.func @transform_2(%arg0: i32) -> (i32, i32) {
    %c0_i32 = arith.constant 0 : i32
    %c0_i32_0 = arith.constant 0 : i32
    %c0_i32_1 = arith.constant 0 : i32
    return %c0_i32, %c0_i32_0 : i32, i32
  }
  func.func @transform_3(%arg0: i32) -> (i32, i32) {
    %c0_i32 = arith.constant 0 : i32
    %c0_i32_0 = arith.constant 0 : i32
    %c0_i32_1 = arith.constant 0 : i32
    return %c0_i32, %c0_i32_0 : i32, i32
  }
  func.func @transform_4(%arg0: i32) -> (i32, i32) {
    %c0_i32 = arith.constant 0 : i32
    %c0_i32_0 = arith.constant 0 : i32
    %c0_i32_1 = arith.constant 0 : i32
    return %c0_i32, %c0_i32_0 : i32, i32
  }
  func.func @transform_5(%arg0: i32) -> (i32, i32) {
    %c0_i32 = arith.constant 0 : i32
    %c0_i32_0 = arith.constant 0 : i32
    %c0_i32_1 = arith.constant 0 : i32
    return %c0_i32, %c0_i32_0 : i32, i32
  }
  func.func @transform_6(%arg0: i32) -> (i32, i32) {
    %c0_i32 = arith.constant 0 : i32
    %c0_i32_0 = arith.constant 0 : i32
    %c0_i32_1 = arith.constant 0 : i32
    return %c0_i32, %c0_i32_0 : i32, i32
  }
  func.func @transform_7(%arg0: i32) -> (i32, i32) {
    %c0_i32 = arith.constant 0 : i32
    %c0_i32_0 = arith.constant 0 : i32
    %c0_i32_1 = arith.constant 0 : i32
    return %c0_i32, %c0_i32_0 : i32, i32
  }
  func.func @transform_8(%arg0: i32) -> (i32, i32) {
    %c0_i32 = arith.constant 0 : i32
    %c0_i32_0 = arith.constant 0 : i32
    %c0_i32_1 = arith.constant 0 : i32
    return %c0_i32, %c0_i32_0 : i32, i32
  }
  func.func @transform_9(%arg0: i32) -> (i32, i32) {
    %c0_i32 = arith.constant 0 : i32
    %c0_i32_0 = arith.constant 0 : i32
    %c0_i32_1 = arith.constant 0 : i32
    return %c0_i32, %c0_i32_0 : i32, i32
  }
  func.func @transform_10(%arg0: i32) -> i32 {
    %c0_i32 = arith.constant 0 : i32
    %c0_i32_0 = arith.constant 0 : i32
    return %c0_i32 : i32
  }
  func.func @transform_11(%arg0: i32) -> (i32, i32) {
    %c0_i32 = arith.constant 0 : i32
    %c0_i32_0 = arith.constant 0 : i32
    return %arg0, %c0_i32 : i32, i32
  }
}

</mosaic_0001>

<llo_original>
// kernel: mse_forward.1
$region0: #{mse_forward.1}
  #allocation0 [shape = 'u32[]', space=smem, size = 0x4, offset = 0x4, fixed_abs, tag = 'smem constant byte address 0x4 - core index']
  #allocation1 [shape = 'u32[144,128]{1,0:T(1,128)}', space=vmem, size = 0x12000, scoped, tag = 'internal scratch']
  #allocation2 [shape = 'f32[1]{0:T(128)S(6)}', space=smem, size = 0x200, scoped, tag = 'scoped memory for mse_forward.1']
  %s0 = inlined_call_operand.vmem [shape: f32[16,256], index: 0, kind: input, shape index: {}]
  %s1 = inlined_call_operand.vmem [shape: f32[16,200], index: 1, kind: input, shape index: {}]
  %s2 = inlined_call_operand.vmem [shape: f32[16,1], index: 2, kind: input, shape index: {}]
  %s3 = inlined_call_operand.vmem [shape: f32[8,72], index: 3, kind: input, shape index: {}]
  %s4 = inlined_call_operand.vmem [shape: f32[8,1], index: 4, kind: input, shape index: {}]
  %s5 = inlined_call_operand.vmem [shape: f32[8,216], index: 5, kind: input, shape index: {}]
  %s6 = inlined_call_operand.vmem [shape: f32[8,1], index: 6, kind: input, shape index: {}]
  %s7 = inlined_call_operand.vmem [shape: f32[200,256], index: 7, kind: input, shape index: {}]
  %s8 = inlined_call_operand.vmem [shape: f32[72,256], index: 8, kind: input, shape index: {}]
  %s9 = inlined_call_operand.vmem [shape: f32[216,256], index: 9, kind: input, shape index: {}]
  %s10 = inlined_call_operand.<no memory space> [shape: f32[1], index: 10, kind: input, shape index: {}]
  %s11 = inlined_call_operand.vmem [shape: f32[16,256], index: 11, kind: output, shape index: {}]
  %s12 = sld [smem:[#allocation0]]
  $region77: #{mse_forward.1} parent=0
    _
  %s14 = ssub.s32 1, %s12
  %s15 = scalar_select 0, %s14, %s12
  %16 = sst [smem:[#allocation2]] %s10
  loop: start=0, step=1, limit=4
  $region2: #{mse_forward.1} parent=0 // loop_pre_header
    _
  $region3: #{mse_forward.1} parent=0 // loop_header
    %s18 = sphi 0, %s22
    %p19 = scmp.ge.s32.totalorder %s18, 4
    %s28 = sphi 0, %s30
    %s31 = sphi 0, %s28
    %s32 = sphi 0, %s31
    %s48 = sphi 0, %s32
    %s52 = sphi 0, %s52
    %s54 = sphi 0, %s52
    %s55 = sphi 0, %s54
    %s69 = sphi 0, %s55
    %s73 = sphi 0, %s73
    %s75 = sphi 0, %s73
    %s76 = sphi 0, %s75
    %s90 = sphi 0, %s76
    %s94 = sphi 0, %s94
    %s96 = sphi 0, %s94
    %s97 = sphi 0, %s96
    %s111 = sphi 0, %s97
    %s115 = sphi 0, %s115
    %s117 = sphi 0, %s115
    %s118 = sphi 0, %s117
    %s132 = sphi 0, %s118
    %s136 = sphi 0, %s136
    %s138 = sphi 0, %s136
    %s139 = sphi 0, %s138
    %s153 = sphi 0, %s139
    %s157 = sphi 0, %s157
    %s159 = sphi 0, %s157
    %s160 = sphi 0, %s159
    %s174 = sphi 0, %s160
    %s178 = sphi 0, %s178
    %s180 = sphi 0, %s178
    %s181 = sphi 0, %s180
    %s195 = sphi 0, %s181
    %s199 = sphi 0, %s199
    %s201 = sphi 0, %s199
    %s202 = sphi 0, %s201
    %s216 = sphi 0, %s202
    %s220 = sphi 0, %s220
    %s222 = sphi 0, %s220
    %s223 = sphi 0, %s222
    %s237 = sphi 0, %s223
    %s241 = sphi 0, %s241
    %s243 = sphi 0, %s241
    %s244 = sphi 0, %s243
    %s258 = sphi 0, %s244
    %s264 = sphi 0, %s266
    %s267 = sphi 0, %s264
    %s268 = sphi 0, %s267
    %s284 = sphi 0, %s268
  $region4: #{mse_forward.1} parent=0 // loop_header_branch
    %21 = sbr.rel (%p19) target = $region8
  $region5: #{mse_forward.1} parent=0 // loop_body
    %s23 = ssub.s32 %s18, 1
    %s24 = ssub.s32 %s18, 2
    %s25 = sadd.s32 %s18, 1
    %s26 = ssub.s32 %s18, %s25
    %p27 = scmp.eq.s32.totalorder %s26, 0
    %s29 = sadd.s32 %s28, 1
    %s30 = scalar_select %p27, %s28, %s29
    %p33 = pneg %p27
    %p34 = scmp.eq.s32.totalorder %s18, 1
    %p35 = por %p33, %p34
    %p36 = scmp.ne.s32.totalorder %s28, %s31
    %p37 = scmp.eq.s32.totalorder %s18, 0
    %p38 = por %p36, %p37
    %p39 = scmp.ne.s32.totalorder %s28, %s31
    %p40 = scmp.eq.s32.totalorder %s23, 1
    %p41 = por %p39, %p40
    %p42 = scmp.ne.s32.totalorder %s31, %s32
    %p43 = scmp.eq.s32.totalorder %s23, 0
    %p44 = por %p42, %p43
    %p45 = scmp.ne.s32.totalorder %s31, %s32
    %p46 = scmp.eq.s32.totalorder %s24, 1
    %p47 = por %p45, %p46
    %p49 = scmp.ne.s32.totalorder %s32, %s48
    %p50 = scmp.eq.s32.totalorder %s24, 0
    %p51 = por %p49, %p50
    %s53 = sadd.s32 %s52, 1
    %p56 = scmp.eq.s32.totalorder %s18, 1
    %p57 = scmp.ne.s32.totalorder %s52, %s54
    %p58 = scmp.eq.s32.totalorder %s18, 0
    %p59 = por %p57, %p58
    %p60 = scmp.ne.s32.totalorder %s52, %s54
    %p61 = scmp.eq.s32.totalorder %s23, 1
    %p62 = por %p60, %p61
    %p63 = scmp.ne.s32.totalorder %s54, %s55
    %p64 = scmp.eq.s32.totalorder %s23, 0
    %p65 = por %p63, %p64
    %p66 = scmp.ne.s32.totalorder %s54, %s55
    %p67 = scmp.eq.s32.totalorder %s24, 1
    %p68 = por %p66, %p67
    %p70 = scmp.ne.s32.totalorder %s55, %s69
    %p71 = scmp.eq.s32.totalorder %s24, 0
    %p72 = por %p70, %p71
    %s74 = sadd.s32 %s73, 1
    %p77 = scmp.eq.s32.totalorder %s18, 1
    %p78 = scmp.ne.s32.totalorder %s73, %s75
    %p79 = scmp.eq.s32.totalorder %s18, 0
    %p80 = por %p78, %p79
    %p81 = scmp.ne.s32.totalorder %s73, %s75
    %p82 = scmp.eq.s32.totalorder %s23, 1
    %p83 = por %p81, %p82
    %p84 = scmp.ne.s32.totalorder %s75, %s76
    %p85 = scmp.eq.s32.totalorder %s23, 0
    %p86 = por %p84, %p85
    %p87 = scmp.ne.s32.totalorder %s75, %s76
    %p88 = scmp.eq.s32.totalorder %s24, 1
    %p89 = por %p87, %p88
    %p91 = scmp.ne.s32.totalorder %s76, %s90
    %p92 = scmp.eq.s32.totalorder %s24, 0
    %p93 = por %p91, %p92
    %s95 = sadd.s32 %s94, 1
    %p98 = scmp.eq.s32.totalorder %s18, 1
    %p99 = scmp.ne.s32.totalorder %s94, %s96
    %p100 = scmp.eq.s32.totalorder %s18, 0
    %p101 = por %p99, %p100
    %p102 = scmp.ne.s32.totalorder %s94, %s96
    %p103 = scmp.eq.s32.totalorder %s23, 1
    %p104 = por %p102, %p103
    %p105 = scmp.ne.s32.totalorder %s96, %s97
    %p106 = scmp.eq.s32.totalorder %s23, 0
    %p107 = por %p105, %p106
    %p108 = scmp.ne.s32.totalorder %s96, %s97
    %p109 = scmp.eq.s32.totalorder %s24, 1
    %p110 = por %p108, %p109
    %p112 = scmp.ne.s32.totalorder %s97, %s111
    %p113 = scmp.eq.s32.totalorder %s24, 0
    %p114 = por %p112, %p113
    %s116 = sadd.s32 %s115, 1
    %p119 = scmp.eq.s32.totalorder %s18, 1
    %p120 = scmp.ne.s32.totalorder %s115, %s117
    %p121 = scmp.eq.s32.totalorder %s18, 0
    %p122 = por %p120, %p121
    %p123 = scmp.ne.s32.totalorder %s115, %s117
    %p124 = scmp.eq.s32.totalorder %s23, 1
    %p125 = por %p123, %p124
    %p126 = scmp.ne.s32.totalorder %s117, %s118
    %p127 = scmp.eq.s32.totalorder %s23, 0
    %p128 = por %p126, %p127
    %p129 = scmp.ne.s32.totalorder %s117, %s118
    %p130 = scmp.eq.s32.totalorder %s24, 1
    %p131 = por %p129, %p130
    %p133 = scmp.ne.s32.totalorder %s118, %s132
    %p134 = scmp.eq.s32.totalorder %s24, 0
    %p135 = por %p133, %p134
    %s137 = sadd.s32 %s136, 1
    %p140 = scmp.eq.s32.totalorder %s18, 1
    %p141 = scmp.ne.s32.totalorder %s136, %s138
    %p142 = scmp.eq.s32.totalorder %s18, 0
    %p143 = por %p141, %p142
    %p144 = scmp.ne.s32.totalorder %s136, %s138
    %p145 = scmp.eq.s32.totalorder %s23, 1
    %p146 = por %p144, %p145
    %p147 = scmp.ne.s32.totalorder %s138, %s139
    %p148 = scmp.eq.s32.totalorder %s23, 0
    %p149 = por %p147, %p148
    %p150 = scmp.ne.s32.totalorder %s138, %s139
    %p151 = scmp.eq.s32.totalorder %s24, 1
    %p152 = por %p150, %p151
    %p154 = scmp.ne.s32.totalorder %s139, %s153
    %p155 = scmp.eq.s32.totalorder %s24, 0
    %p156 = por %p154, %p155
    %s158 = sadd.s32 %s157, 1
    %p161 = scmp.eq.s32.totalorder %s18, 1
    %p162 = scmp.ne.s32.totalorder %s157, %s159
    %p163 = scmp.eq.s32.totalorder %s18, 0
    %p164 = por %p162, %p163
    %p165 = scmp.ne.s32.totalorder %s157, %s159
    %p166 = scmp.eq.s32.totalorder %s23, 1
    %p167 = por %p165, %p166
    %p168 = scmp.ne.s32.totalorder %s159, %s160
    %p169 = scmp.eq.s32.totalorder %s23, 0
    %p170 = por %p168, %p169
    %p171 = scmp.ne.s32.totalorder %s159, %s160
    %p172 = scmp.eq.s32.totalorder %s24, 1
    %p173 = por %p171, %p172
    %p175 = scmp.ne.s32.totalorder %s160, %s174
    %p176 = scmp.eq.s32.totalorder %s24, 0
    %p177 = por %p175, %p176
    %s179 = sadd.s32 %s178, 1
    %p182 = scmp.eq.s32.totalorder %s18, 1
    %p183 = scmp.ne.s32.totalorder %s178, %s180
    %p184 = scmp.eq.s32.totalorder %s18, 0
    %p185 = por %p183, %p184
    %p186 = scmp.ne.s32.totalorder %s178, %s180
    %p187 = scmp.eq.s32.totalorder %s23, 1
    %p188 = por %p186, %p187
    %p189 = scmp.ne.s32.totalorder %s180, %s181
    %p190 = scmp.eq.s32.totalorder %s23, 0
    %p191 = por %p189, %p190
    %p192 = scmp.ne.s32.totalorder %s180, %s181
    %p193 = scmp.eq.s32.totalorder %s24, 1
    %p194 = por %p192, %p193
    %p196 = scmp.ne.s32.totalorder %s181, %s195
    %p197 = scmp.eq.s32.totalorder %s24, 0
    %p198 = por %p196, %p197
    %s200 = sadd.s32 %s199, 1
    %p203 = scmp.eq.s32.totalorder %s18, 1
    %p204 = scmp.ne.s32.totalorder %s199, %s201
    %p205 = scmp.eq.s32.totalorder %s18, 0
    %p206 = por %p204, %p205
    %p207 = scmp.ne.s32.totalorder %s199, %s201
    %p208 = scmp.eq.s32.totalorder %s23, 1
    %p209 = por %p207, %p208
    %p210 = scmp.ne.s32.totalorder %s201, %s202
    %p211 = scmp.eq.s32.totalorder %s23, 0
    %p212 = por %p210, %p211
    %p213 = scmp.ne.s32.totalorder %s201, %s202
    %p214 = scmp.eq.s32.totalorder %s24, 1
    %p215 = por %p213, %p214
    %p217 = scmp.ne.s32.totalorder %s202, %s216
    %p218 = scmp.eq.s32.totalorder %s24, 0
    %p219 = por %p217, %p218
    %s221 = sadd.s32 %s220, 1
    %p224 = scmp.eq.s32.totalorder %s18, 1
    %p225 = scmp.ne.s32.totalorder %s220, %s222
    %p226 = scmp.eq.s32.totalorder %s18, 0
    %p227 = por %p225, %p226
    %p228 = scmp.ne.s32.totalorder %s220, %s222
    %p229 = scmp.eq.s32.totalorder %s23, 1
    %p230 = por %p228, %p229
    %p231 = scmp.ne.s32.totalorder %s222, %s223
    %p232 = scmp.eq.s32.totalorder %s23, 0
    %p233 = por %p231, %p232
    %p234 = scmp.ne.s32.totalorder %s222, %s223
    %p235 = scmp.eq.s32.totalorder %s24, 1
    %p236 = por %p234, %p235
    %p238 = scmp.ne.s32.totalorder %s223, %s237
    %p239 = scmp.eq.s32.totalorder %s24, 0
    %p240 = por %p238, %p239
    %s242 = sadd.s32 %s241, 1
    %p245 = scmp.eq.s32.totalorder %s18, 1
    %p246 = scmp.ne.s32.totalorder %s241, %s243
    %p247 = scmp.eq.s32.totalorder %s18, 0
    %p248 = por %p246, %p247
    %p249 = scmp.ne.s32.totalorder %s241, %s243
    %p250 = scmp.eq.s32.totalorder %s23, 1
    %p251 = por %p249, %p250
    %p252 = scmp.ne.s32.totalorder %s243, %s244
    %p253 = scmp.eq.s32.totalorder %s23, 0
    %p254 = por %p252, %p253
    %p255 = scmp.ne.s32.totalorder %s243, %s244
    %p256 = scmp.eq.s32.totalorder %s24, 1
    %p257 = por %p255, %p256
    %p259 = scmp.ne.s32.totalorder %s244, %s258
    %p260 = scmp.eq.s32.totalorder %s24, 0
    %p261 = por %p259, %p260
    %s262 = ssub.s32 %s18, %s25
    %p263 = scmp.eq.s32.totalorder %s262, 0
    %s265 = sadd.s32 %s264, 1
    %s266 = scalar_select %p263, %s264, %s265
    %p269 = pneg %p263
    %p270 = scmp.eq.s32.totalorder %s18, 1
    %p271 = por %p269, %p270
    %p272 = scmp.ne.s32.totalorder %s264, %s267
    %p273 = scmp.eq.s32.totalorder %s18, 0
    %p274 = por %p272, %p273
    %p275 = scmp.ne.s32.totalorder %s264, %s267
    %p276 = scmp.eq.s32.totalorder %s23, 1
    %p277 = por %p275, %p276
    %p278 = scmp.ne.s32.totalorder %s267, %s268
    %p279 = scmp.eq.s32.totalorder %s23, 0
    %p280 = por %p278, %p279
    %p281 = scmp.ne.s32.totalorder %s267, %s268
    %p282 = scmp.eq.s32.totalorder %s24, 1
    %p283 = por %p281, %p282
    %p285 = scmp.ne.s32.totalorder %s268, %s284
    %p286 = scmp.eq.s32.totalorder %s24, 0
    %p287 = por %p285, %p286
    %p288 = scmp.le.s32.totalorder 1, %s18
    %p289 = scmp.lt.s32.totalorder %s18, 3
    %p290 = pnand %p288, %p289
    %p291 = pneg %p290
    // Predicated region
    $region9: #{mse_forward.1} parent=5 // pred_check
      _
    $region10: #{mse_forward.1} parent=5 // pred_check_branch
      %293 = sbr.rel (%p290) target = $region12
    $region11: #{mse_forward.1} parent=5 // pred_region
      %s294 = ssub.s32 %s18, 1
      // Predicated region
      $region13: #{mse_forward.1} parent=11 // pred_check
        %p295 = pneg %p65
      $region14: #{mse_forward.1} parent=11 // pred_check_branch
        %297 = sbr.rel (%p295) target = $region16
      $region15: #{mse_forward.1} parent=11 // pred_region
        _
      $region16: #{mse_forward.1} parent=11 // pred_fallthru
        _
      // Predicated region
      $region17: #{mse_forward.1} parent=11 // pred_check
        %p298 = pneg %p86
      $region18: #{mse_forward.1} parent=11 // pred_check_branch
        %300 = sbr.rel (%p298) target = $region20
      $region19: #{mse_forward.1} parent=11 // pred_region
        _
      $region20: #{mse_forward.1} parent=11 // pred_fallthru
        _
      // Predicated region
      $region21: #{mse_forward.1} parent=11 // pred_check
        %p301 = pneg %p107
      $region22: #{mse_forward.1} parent=11 // pred_check_branch
        %303 = sbr.rel (%p301) target = $region24
      $region23: #{mse_forward.1} parent=11 // pred_region
        _
      $region24: #{mse_forward.1} parent=11 // pred_fallthru
        _
      // Predicated region
      $region25: #{mse_forward.1} parent=11 // pred_check
        %p304 = pneg %p128
      $region26: #{mse_forward.1} parent=11 // pred_check_branch
        %306 = sbr.rel (%p304) target = $region28
      $region27: #{mse_forward.1} parent=11 // pred_region
        _
      $region28: #{mse_forward.1} parent=11 // pred_fallthru
        _
      // Predicated region
      $region29: #{mse_forward.1} parent=11 // pred_check
        %p307 = pneg %p149
      $region30: #{mse_forward.1} parent=11 // pred_check_branch
        %309 = sbr.rel (%p307) target = $region32
      $region31: #{mse_forward.1} parent=11 // pred_region
        _
      $region32: #{mse_forward.1} parent=11 // pred_fallthru
        _
      // Predicated region
      $region33: #{mse_forward.1} parent=11 // pred_check
        %p310 = pneg %p170
      $region34: #{mse_forward.1} parent=11 // pred_check_branch
        %312 = sbr.rel (%p310) target = $region36
      $region35: #{mse_forward.1} parent=11 // pred_region
        _
      $region36: #{mse_forward.1} parent=11 // pred_fallthru
        _
      // Predicated region
      $region37: #{mse_forward.1} parent=11 // pred_check
        %p313 = pneg %p191
      $region38: #{mse_forward.1} parent=11 // pred_check_branch
        %315 = sbr.rel (%p313) target = $region40
      $region39: #{mse_forward.1} parent=11 // pred_region
        _
      $region40: #{mse_forward.1} parent=11 // pred_fallthru
        _
      // Predicated region
      $region41: #{mse_forward.1} parent=11 // pred_check
        %p316 = pneg %p212
      $region42: #{mse_forward.1} parent=11 // pred_check_branch
        %318 = sbr.rel (%p316) target = $region44
      $region43: #{mse_forward.1} parent=11 // pred_region
        _
      $region44: #{mse_forward.1} parent=11 // pred_fallthru
        _
      // Predicated region
      $region45: #{mse_forward.1} parent=11 // pred_check
        %p319 = pneg %p233
      $region46: #{mse_forward.1} parent=11 // pred_check_branch
        %321 = sbr.rel (%p319) target = $region48
      $region47: #{mse_forward.1} parent=11 // pred_region
        _
      $region48: #{mse_forward.1} parent=11 // pred_fallthru
        _
      // Predicated region
      $region49: #{mse_forward.1} parent=11 // pred_check
        %p322 = pneg %p254
      $region50: #{mse_forward.1} parent=11 // pred_check_branch
        %324 = sbr.rel (%p322) target = $region52
      $region51: #{mse_forward.1} parent=11 // pred_region
        _
      $region52: #{mse_forward.1} parent=11 // pred_fallthru
        _
    $region12: #{mse_forward.1} parent=5 // pred_fallthru
      _
    %p325 = scmp.lt.s32.totalorder %s18, 2
    // Predicated region
    $region53: #{mse_forward.1} parent=5 // pred_check
      %p326 = pneg %p325
    $region54: #{mse_forward.1} parent=5 // pred_check_branch
      %328 = sbr.rel (%p326) target = $region56
    $region55: #{mse_forward.1} parent=5 // pred_region
      // Predicated region
      $region57: #{mse_forward.1} parent=55 // pred_check
        %p329 = pneg %p38
      $region58: #{mse_forward.1} parent=55 // pred_check_branch
        %331 = sbr.rel (%p329) target = $region60
      $region59: #{mse_forward.1} parent=55 // pred_region
        %p332 = scmp.lt.s32.totalorder %s18, 1
        %s333 = scalar_select %p332, %s18, 1
        %s334 = smul.addr %s333, 2
        %s335 = smul.addr %s334, 8
        %s336 = scalar_lea.vmem %s0, %s335
      $region60: #{mse_forward.1} parent=55 // pred_fallthru
        _
    $region56: #{mse_forward.1} parent=5 // pred_fallthru
      _
    %p337 = scmp.le.s32.totalorder 1, %s18
    %p338 = scmp.lt.s32.totalorder %s18, 3
    %p339 = pnand %p337, %p338
    %p340 = pneg %p339
    // Predicated region
    $region61: #{mse_forward.1} parent=5 // pred_check
      _
    $region62: #{mse_forward.1} parent=5 // pred_check_branch
      %342 = sbr.rel (%p339) target = $region64
    $region63: #{mse_forward.1} parent=5 // pred_region
      %s343 = ssub.s32 %s18, 1
      %p344 = scmp.lt.s32.totalorder %s23, 1
      %s345 = scalar_select %p344, %s23, 1
      %s346 = smul.addr %s345, 2
      %s347 = smul.addr %s346, 8
      %s348 = scalar_lea.vmem %s0, %s347
      %p349 = pneg %p44
      %p350 = pneg %p41
      %p351 = pneg %p65
      %p352 = pneg %p62
      %p353 = pneg %p86
      %p354 = pneg %p83
      %p355 = pneg %p107
      %p356 = pneg %p104
      %p357 = pneg %p128
      %p358 = pneg %p125
      %p359 = pneg %p149
      %p360 = pneg %p146
      %p361 = pneg %p170
      %p362 = pneg %p167
      %p363 = pneg %p191
      %p364 = pneg %p188
      %p365 = pneg %p212
      %p366 = pneg %p209
      %p367 = pneg %p233
      %p368 = pneg %p230
      %p369 = pneg %p254
      %p370 = pneg %p251
      %p371 = pneg %p280
      %p372 = pneg %p277
      %p373 = scmp.lt.s32.totalorder %s23, 1
      %s374 = scalar_select %p373, %s23, 1
      %s375 = smul.addr %s374, 2
      %s376 = smul.addr %s375, 8
      %s377 = scalar_lea.vmem %s11, %s376
      %p378 = scmp.lt.s32.totalorder %s23, 1
      %s379 = scalar_select %p378, %s23, 1
      %s380 = smul.addr %s379, 2
      %s381 = smul.addr %s380, 8
      %s382 = scalar_lea.vmem %s0, %s381
      %p383 = scmp.lt.s32.totalorder %s23, 1
      %s384 = scalar_select %p383, %s23, 1
      %s385 = smul.addr %s384, 2
      %s386 = smul.addr %s385, 8
      %s387 = scalar_lea.vmem %s11, %s386
      %v388 = vld [vmem:[%s382] sm:$0xff]
      %v389 = vld [vmem:[%s382 + $0x8] sm:$0xff]
      %s390 = sld [smem:[#allocation2]]
      %391 = vrot.lane.b32.xlu0 %v388, 34
      %v392 = vpop.permute.xlu0 %391
      %393 = vrot.lane.b32.xlu0 %v389, 34
      %v394 = vpop.permute.xlu0 %393
      %v395 = vlaneseq
      %v396 = vand.u32 %v395, 127
      %vm397 = vcmp.lt.s32.totalorder %v396, 34
      %v398 = vsel %vm397, %v392, %v394
      %v399 = vsel %vm397, %v394, %v392
      %400 = vrot.lane.b32.xlu0 %v388, 33
      %v401 = vpop.permute.xlu0 %400
      %402 = vrot.lane.b32.xlu0 %v389, 33
      %v403 = vpop.permute.xlu0 %402
      %vm404 = vcmp.lt.s32.totalorder %v396, 33
      %v405 = vsel %vm404, %v401, %v403
      %v406 = vsel %vm404, %v403, %v401
      %407 = vrot.lane.b32.xlu0 %v388, 32
      %v408 = vpop.permute.xlu0 %407
      %409 = vrot.lane.b32.xlu0 %v389, 32
      %v410 = vpop.permute.xlu0 %409
      %vm411 = vcmp.lt.s32.totalorder %v396, 32
      %v412 = vsel %vm411, %v408, %v410
      %v413 = vsel %vm411, %v410, %v408
      %414 = vrot.lane.b32.xlu0 %v388, 31
      %v415 = vpop.permute.xlu0 %414
      %416 = vrot.lane.b32.xlu0 %v389, 31
      %v417 = vpop.permute.xlu0 %416
      %vm418 = vcmp.lt.s32.totalorder %v396, 31
      %v419 = vsel %vm418, %v415, %v417
      %v420 = vsel %vm418, %v417, %v415
      %421 = vrot.lane.b32.xlu0 %v388, 30
      %v422 = vpop.permute.xlu0 %421
      %423 = vrot.lane.b32.xlu0 %v389, 30
      %v424 = vpop.permute.xlu0 %423
      %vm425 = vcmp.lt.s32.totalorder %v396, 30
      %v426 = vsel %vm425, %v422, %v424
      %v427 = vsel %vm425, %v424, %v422
      %428 = vrot.lane.b32.xlu0 %v388, 18
      %v429 = vpop.permute.xlu0 %428
      %430 = vrot.lane.b32.xlu0 %v389, 18
      %v431 = vpop.permute.xlu0 %430
      %vm432 = vcmp.lt.s32.totalorder %v396, 18
      %v433 = vsel %vm432, %v429, %v431
      %v434 = vsel %vm432, %v431, %v429
      %435 = vrot.lane.b32.xlu0 %v388, 17
      %v436 = vpop.permute.xlu0 %435
      %437 = vrot.lane.b32.xlu0 %v389, 17
      %v438 = vpop.permute.xlu0 %437
      %vm439 = vcmp.lt.s32.totalorder %v396, 17
      %v440 = vsel %vm439, %v436, %v438
      %v441 = vsel %vm439, %v438, %v436
      %442 = vrot.lane.b32.xlu0 %v388, 16
      %v443 = vpop.permute.xlu0 %442
      %444 = vrot.lane.b32.xlu0 %v389, 16
      %v445 = vpop.permute.xlu0 %444
      %vm446 = vcmp.lt.s32.totalorder %v396, 16
      %v447 = vsel %vm446, %v443, %v445
      %v448 = vsel %vm446, %v445, %v443
      %449 = vrot.lane.b32.xlu0 %v388, 15
      %v450 = vpop.permute.xlu0 %449
      %451 = vrot.lane.b32.xlu0 %v389, 15
      %v452 = vpop.permute.xlu0 %451
      %vm453 = vcmp.lt.s32.totalorder %v396, 15
      %v454 = vsel %vm453, %v450, %v452
      %v455 = vsel %vm453, %v452, %v450
      %456 = vrot.lane.b32.xlu0 %v388, 14
      %v457 = vpop.permute.xlu0 %456
      %458 = vrot.lane.b32.xlu0 %v389, 14
      %v459 = vpop.permute.xlu0 %458
      %vm460 = vcmp.lt.s32.totalorder %v396, 14
      %v461 = vsel %vm460, %v457, %v459
      %v462 = vsel %vm460, %v459, %v457
      %463 = vrot.lane.b32.xlu0 %v388, 2
      %v464 = vpop.permute.xlu0 %463
      %465 = vrot.lane.b32.xlu0 %v389, 2
      %v466 = vpop.permute.xlu0 %465
      %vm467 = vcmp.lt.s32.totalorder %v396, 2
      %v468 = vsel %vm467, %v464, %v466
      %v469 = vsel %vm467, %v466, %v464
      %470 = vrot.lane.b32.xlu0 %v388, 1
      %v471 = vpop.permute.xlu0 %470
      %472 = vrot.lane.b32.xlu0 %v389, 1
      %v473 = vpop.permute.xlu0 %472
      %vm474 = vcmp.lt.s32.totalorder %v396, 1
      %v475 = vsel %vm474, %v471, %v473
      %v476 = vsel %vm474, %v473, %v471
      %477 = vrot.lane.b32.xlu0 %v388, 127
      %v478 = vpop.permute.xlu0 %477
      %479 = vrot.lane.b32.xlu0 %v389, 127
      %v480 = vpop.permute.xlu0 %479
      %vm481 = vcmp.lt.s32.totalorder %v396, 127
      %v482 = vsel %vm481, %v478, %v480
      %v483 = vsel %vm481, %v480, %v478
      %484 = vrot.lane.b32.xlu0 %v388, 126
      %v485 = vpop.permute.xlu0 %484
      %486 = vrot.lane.b32.xlu0 %v389, 126
      %v487 = vpop.permute.xlu0 %486
      %vm488 = vcmp.lt.s32.totalorder %v396, 126
      %v489 = vsel %vm488, %v485, %v487
      %v490 = vsel %vm488, %v487, %v485
      %491 = vrot.lane.b32.xlu0 %v388, 114
      %v492 = vpop.permute.xlu0 %491
      %493 = vrot.lane.b32.xlu0 %v389, 114
      %v494 = vpop.permute.xlu0 %493
      %vm495 = vcmp.lt.s32.totalorder %v396, 114
      %v496 = vsel %vm495, %v492, %v494
      %v497 = vsel %vm495, %v494, %v492
      %498 = vrot.lane.b32.xlu0 %v388, 113
      %v499 = vpop.permute.xlu0 %498
      %500 = vrot.lane.b32.xlu0 %v389, 113
      %v501 = vpop.permute.xlu0 %500
      %vm502 = vcmp.lt.s32.totalorder %v396, 113
      %v503 = vsel %vm502, %v499, %v501
      %v504 = vsel %vm502, %v501, %v499
      %505 = vrot.lane.b32.xlu0 %v388, 112
      %v506 = vpop.permute.xlu0 %505
      %507 = vrot.lane.b32.xlu0 %v389, 112
      %v508 = vpop.permute.xlu0 %507
      %vm509 = vcmp.lt.s32.totalorder %v396, 112
      %v510 = vsel %vm509, %v506, %v508
      %v511 = vsel %vm509, %v508, %v506
      %512 = vrot.lane.b32.xlu0 %v388, 111
      %v513 = vpop.permute.xlu0 %512
      %514 = vrot.lane.b32.xlu0 %v389, 111
      %v515 = vpop.permute.xlu0 %514
      %vm516 = vcmp.lt.s32.totalorder %v396, 111
      %v517 = vsel %vm516, %v513, %v515
      %v518 = vsel %vm516, %v515, %v513
      %519 = vrot.lane.b32.xlu0 %v388, 110
      %v520 = vpop.permute.xlu0 %519
      %521 = vrot.lane.b32.xlu0 %v389, 110
      %v522 = vpop.permute.xlu0 %521
      %vm523 = vcmp.lt.s32.totalorder %v396, 110
      %v524 = vsel %vm523, %v520, %v522
      %v525 = vsel %vm523, %v522, %v520
      %526 = vrot.lane.b32.xlu0 %v388, 98
      %v527 = vpop.permute.xlu0 %526
      %528 = vrot.lane.b32.xlu0 %v389, 98
      %v529 = vpop.permute.xlu0 %528
      %vm530 = vcmp.lt.s32.totalorder %v396, 98
      %v531 = vsel %vm530, %v527, %v529
      %v532 = vsel %vm530, %v529, %v527
      %533 = vrot.lane.b32.xlu0 %v388, 97
      %v534 = vpop.permute.xlu0 %533
      %535 = vrot.lane.b32.xlu0 %v389, 97
      %v536 = vpop.permute.xlu0 %535
      %vm537 = vcmp.lt.s32.totalorder %v396, 97
      %v538 = vsel %vm537, %v534, %v536
      %v539 = vsel %vm537, %v536, %v534
      %540 = vrot.lane.b32.xlu0 %v388, 96
      %v541 = vpop.permute.xlu0 %540
      %542 = vrot.lane.b32.xlu0 %v389, 96
      %v543 = vpop.permute.xlu0 %542
      %vm544 = vcmp.lt.s32.totalorder %v396, 96
      %v545 = vsel %vm544, %v541, %v543
      %v546 = vsel %vm544, %v543, %v541
      %547 = vrot.lane.b32.xlu0 %v388, 95
      %v548 = vpop.permute.xlu0 %547
      %549 = vrot.lane.b32.xlu0 %v389, 95
      %v550 = vpop.permute.xlu0 %549
      %vm551 = vcmp.lt.s32.totalorder %v396, 95
      %v552 = vsel %vm551, %v548, %v550
      %v553 = vsel %vm551, %v550, %v548
      %554 = vrot.lane.b32.xlu0 %v388, 94
      %v555 = vpop.permute.xlu0 %554
      %556 = vrot.lane.b32.xlu0 %v389, 94
      %v557 = vpop.permute.xlu0 %556
      %vm558 = vcmp.lt.s32.totalorder %v396, 94
      %v559 = vsel %vm558, %v555, %v557
      %v560 = vsel %vm558, %v557, %v555
      %v561 = vld [vmem:[%s7] sm:$0xff]
      %v562 = vld [vmem:[%s7 + $0x8] sm:$0xff]
      %v563 = vld [vmem:[%s7 + $0x10] sm:$0xff]
      %v564 = vld [vmem:[%s7 + $0x18] sm:$0xff]
      %v565 = vld [vmem:[%s7 + $0x20] sm:$0xff]
      %v566 = vld [vmem:[%s7 + $0x28] sm:$0xff]
      %v567 = vld [vmem:[%s7 + $0x30] sm:$0xff]
      %v568 = vld [vmem:[%s7 + $0x38] sm:$0xff]
      %v569 = vld [vmem:[%s7 + $0x40] sm:$0xff]
      %v570 = vld [vmem:[%s7 + $0x48] sm:$0xff]
      %v571 = vld [vmem:[%s7 + $0x50] sm:$0xff]
      %v572 = vld [vmem:[%s7 + $0x58] sm:$0xff]
      %v573 = vld [vmem:[%s7 + $0x60] sm:$0xff]
      %v574 = vld [vmem:[%s7 + $0x68] sm:$0xff]
      %v575 = vld [vmem:[%s7 + $0x70] sm:$0xff]
      %v576 = vld [vmem:[%s7 + $0x78] sm:$0xff]
      %v577 = vld [vmem:[%s7 + $0x80] sm:$0xff]
      %v578 = vld [vmem:[%s7 + $0x88] sm:$0xff]
      %v579 = vld [vmem:[%s7 + $0x90] sm:$0xff]
      %v580 = vld [vmem:[%s7 + $0x98] sm:$0xff]
      %v581 = vld [vmem:[%s7 + $0xa0] sm:$0xff]
      %v582 = vld [vmem:[%s7 + $0xa8] sm:$0xff]
      %v583 = vld [vmem:[%s7 + $0xb0] sm:$0xff]
      %v584 = vld [vmem:[%s7 + $0xb8] sm:$0xff]
      %v585 = vld [vmem:[%s7 + $0xc0] sm:$0xff]
      %v586 = vld [vmem:[%s7 + $0xc8] sm:$0xff]
      %v587 = vld [vmem:[%s7 + $0xd0] sm:$0xff]
      %v588 = vld [vmem:[%s7 + $0xd8] sm:$0xff]
      %v589 = vld [vmem:[%s7 + $0xe0] sm:$0xff]
      %v590 = vld [vmem:[%s7 + $0xe8] sm:$0xff]
      %v591 = vld [vmem:[%s7 + $0xf0] sm:$0xff]
      %v592 = vld [vmem:[%s7 + $0xf8] sm:$0xff]
      %v593 = vld [vmem:[%s7 + $0x100] sm:$0xff]
      %v594 = vld [vmem:[%s7 + $0x108] sm:$0xff]
      %v595 = vld [vmem:[%s7 + $0x110] sm:$0xff]
      %v596 = vld [vmem:[%s7 + $0x118] sm:$0xff]
      %v597 = vld [vmem:[%s7 + $0x120] sm:$0xff]
      %v598 = vld [vmem:[%s7 + $0x128] sm:$0xff]
      %v599 = vld [vmem:[%s7 + $0x130] sm:$0xff]
      %v600 = vld [vmem:[%s7 + $0x138] sm:$0xff]
      %v601 = vld [vmem:[%s7 + $0x140] sm:$0xff]
      %v602 = vld [vmem:[%s7 + $0x148] sm:$0xff]
      %v603 = vld [vmem:[%s7 + $0x150] sm:$0xff]
      %v604 = vld [vmem:[%s7 + $0x158] sm:$0xff]
      %v605 = vld [vmem:[%s7 + $0x160] sm:$0xff]
      %v606 = vld [vmem:[%s7 + $0x168] sm:$0xff]
      %v607 = vld [vmem:[%s7 + $0x170] sm:$0xff]
      %v608 = vld [vmem:[%s7 + $0x178] sm:$0xff]
      %v609 = vld [vmem:[%s7 + $0x180] sm:$0xff]
      %v610 = vld [vmem:[%s7 + $0x188] sm:$0xff]
      %v611 = vmul.f32 %v399, %v561
      %v612 = vmul.f32 %v398, %v562
      %v613 = vmul.f32 %v406, %v563
      %v614 = vmul.f32 %v405, %v564
      %v615 = vmul.f32 %v413, %v565
      %v616 = vmul.f32 %v412, %v566
      %v617 = vmul.f32 %v420, %v567
      %v618 = vmul.f32 %v419, %v568
      %v619 = vmul.f32 %v427, %v569
      %v620 = vmul.f32 %v426, %v570
      %v621 = vmul.f32 %v434, %v571
      %v622 = vmul.f32 %v433, %v572
      %v623 = vmul.f32 %v441, %v573
      %v624 = vmul.f32 %v440, %v574
      %v625 = vmul.f32 %v448, %v575
      %v626 = vmul.f32 %v447, %v576
      %v627 = vmul.f32 %v455, %v577
      %v628 = vmul.f32 %v454, %v578
      %v629 = vmul.f32 %v462, %v579
      %v630 = vmul.f32 %v461, %v580
      %v631 = vmul.f32 %v469, %v581
      %v632 = vmul.f32 %v468, %v582
      %v633 = vmul.f32 %v476, %v583
      %v634 = vmul.f32 %v475, %v584
      %v635 = vmul.f32 %v388, %v585
      %v636 = vmul.f32 %v389, %v586
      %v637 = vmul.f32 %v482, %v587
      %v638 = vmul.f32 %v483, %v588
      %v639 = vmul.f32 %v489, %v589
      %v640 = vmul.f32 %v490, %v590
      %v641 = vmul.f32 %v496, %v591
      %v642 = vmul.f32 %v497, %v592
      %v643 = vmul.f32 %v503, %v593
      %v644 = vmul.f32 %v504, %v594
      %v645 = vmul.f32 %v510, %v595
      %v646 = vmul.f32 %v511, %v596
      %v647 = vmul.f32 %v517, %v597
      %v648 = vmul.f32 %v518, %v598
      %v649 = vmul.f32 %v524, %v599
      %v650 = vmul.f32 %v525, %v600
      %v651 = vmul.f32 %v531, %v601
      %v652 = vmul.f32 %v532, %v602
      %v653 = vmul.f32 %v538, %v603
      %v654 = vmul.f32 %v539, %v604
      %v655 = vmul.f32 %v545, %v605
      %v656 = vmul.f32 %v546, %v606
      %v657 = vmul.f32 %v552, %v607
      %v658 = vmul.f32 %v553, %v608
      %v659 = vmul.f32 %v559, %v609
      %v660 = vmul.f32 %v560, %v610
      %v661 = vld [vmem:[%s1] sm:$0xff]
      %v662 = vld [vmem:[%s1 + $0x8] sm:$0xff]
      %v663 = vld [vmem:[%s1 + $0x10] sm:$0xff]
      %v664 = vld [vmem:[%s1 + $0x18] sm:$0xff]
      %v665 = vld [vmem:[%s2] sm:$0xff]
      %v666 = vld [vmem:[%s2 + $0x8] sm:$0xff]
      %668 = vset.pattern.permute.xlu0 0
      %669 = vperm.xlu0 %668, %v665
      %v670 = vpop.permute.xlu0 %669
      %673 = vset.pattern.permute.xlu0 0
      %674 = vperm.xlu0 %673, %v666
      %v675 = vpop.permute.xlu0 %674
      %vm677 = vcmask 588800
      %v679 = vsel %vm677, %v662, 0
      %v682 = vsel %vm677, %v664, 0
      %684 = vmatprep.subr.mxu0 %v612
      %685 = vmatpush1.msra.mxu0 %v611
      %686 = vmatprep.subr.mxu0 %v614
      %687 = vmatpush1.msra.mxu0 %v613
      %688 = vmatprep.subr.mxu0 %v616
      %689 = vmatpush1.msra.mxu0 %v615
      %690 = vmatprep.subr.mxu0 %v618
      %691 = vmatpush1.msra.mxu0 %v617
      %692 = vmatprep.subr.mxu0 %v620
      %693 = vmatpush1.msra.mxu0 %v619
      %694 = vmatprep.subr.mxu0 %v622
      %695 = vmatpush1.msra.mxu0 %v621
      %696 = vmatprep.subr.mxu0 %v624
      %697 = vmatpush1.msra.mxu0 %v623
      %698 = vmatprep.subr.mxu0 %v626
      %699 = vmatpush1.msra.mxu0 %v625
      %700 = vmatprep.subr.mxu0 %v628
      %701 = vmatpush1.msra.mxu0 %v627
      %702 = vmatprep.subr.mxu0 %v630
      %703 = vmatpush1.msra.mxu0 %v629
      %704 = vmatprep.subr.mxu0 %v632
      %705 = vmatpush1.msra.mxu0 %v631
      %706 = vmatprep.subr.mxu0 %v634
      %707 = vmatpush1.msra.mxu0 %v633
      %708 = vmatprep.subr.mxu0 %v636
      %709 = vmatpush1.msra.mxu0 %v635
      %710 = vmatprep.subr.mxu0 %v638
      %711 = vmatpush1.msra.mxu0 %v637
      %712 = vmatprep.subr.mxu0 %v640
      %713 = vmatpush1.msra.mxu0 %v639
      %714 = vmatprep.subr.mxu0 %v642
      %715 = vmatpush1.msra.mxu0 %v641
      %716 = vmatprep.subr.mxu0 %v644
      %717 = vmatpush1.msra.mxu0 %v643
      %718 = vmatprep.subr.mxu0 %v646
      %719 = vmatpush1.msra.mxu0 %v645
      %720 = vmatprep.subr.mxu0 %v648
      %721 = vmatpush1.msra.mxu0 %v647
      %722 = vmatprep.subr.mxu0 %v650
      %723 = vmatpush1.msra.mxu0 %v649
      %724 = vmatprep.subr.mxu0 %v652
      %725 = vmatpush1.msra.mxu0 %v651
      %726 = vmatprep.subr.mxu0 %v654
      %727 = vmatpush1.msra.mxu0 %v653
      %728 = vmatprep.subr.mxu0 %v656
      %729 = vmatpush1.msra.mxu0 %v655
      %730 = vmatprep.subr.mxu0 %v658
      %731 = vmatpush1.msra.mxu0 %v657
      %732 = vmatprep.subr.mxu0 %v660
      %733 = vmatpush1.msra.mxu0 %v659
      %734 = vmatprep.subr.mxu0 0.0
      %735 = vmatpush1.msra.mxu0 0.0
      %736 = vmatprep.subr.mxu0 0.0
      %737 = vmatpush1.msra.mxu0 0.0
      %738 = vmatprep.subr.mxu0 0.0
      %739 = vmatpush1.msra.mxu0 0.0
      %740 = vmatprep.subr.mxu0 0.0
      %741 = vmatpush1.msra.mxu0 0.0
      %742 = vmatprep.subr.mxu0 0.0
      %743 = vmatpush1.msra.mxu0 0.0
      %744 = vmatprep.subr.mxu0 0.0
      %745 = vmatpush1.msra.mxu0 0.0
      %746 = vmatprep.subr.mxu0 0.0
      %747 = vmatpush1.msra.mxu0 0.0
      %748 = vmatprep.mubr.f32.mxu0 %v679
      %749 = vmatmul.mubr.f32.gmra.mrb[0].mxu0 %v661
      %v750 = vpop.f32.mrb[0].mxu0
      %v751 = vadd.f32 %v670, %v750
      %v752 = vpop.f32.mrb[0].mxu0
      %v753 = vadd.f32 %v670, %v752
      %754 = vmatprep.mubr.f32.mxu0 %v682
      %755 = vmatmul.mubr.f32.gmra.mrb[0].mxu0 %v663
      %v756 = vpop.f32.mrb[0].mxu0
      %v757 = vadd.f32 %v675, %v756
      %v758 = vpop.f32.mrb[0].mxu0
      %v759 = vadd.f32 %v675, %v758
      %760 = vdwg.mxu0
      %v761 = vmax.f32 %v751, 0.0
      %v762 = vmax.f32 %v753, 0.0
      %v763 = vmax.f32 %v757, 0.0
      %v764 = vmax.f32 %v759, 0.0
      %765 = vrot.lane.b32.xlu0 %v388, 51
      %v766 = vpop.permute.xlu0 %765
      %767 = vrot.lane.b32.xlu0 %v389, 51
      %v768 = vpop.permute.xlu0 %767
      %vm769 = vcmp.lt.s32.totalorder %v396, 51
      %v770 = vsel %vm769, %v766, %v768
      %v771 = vsel %vm769, %v768, %v766
      %772 = vrot.lane.b32.xlu0 %v388, 48
      %v773 = vpop.permute.xlu0 %772
      %774 = vrot.lane.b32.xlu0 %v389, 48
      %v775 = vpop.permute.xlu0 %774
      %vm776 = vcmp.lt.s32.totalorder %v396, 48
      %v777 = vsel %vm776, %v773, %v775
      %v778 = vsel %vm776, %v775, %v773
      %779 = vrot.lane.b32.xlu0 %v388, 45
      %v780 = vpop.permute.xlu0 %779
      %781 = vrot.lane.b32.xlu0 %v389, 45
      %v782 = vpop.permute.xlu0 %781
      %vm783 = vcmp.lt.s32.totalorder %v396, 45
      %v784 = vsel %vm783, %v780, %v782
      %v785 = vsel %vm783, %v782, %v780
      %786 = vrot.lane.b32.xlu0 %v388, 3
      %v787 = vpop.permute.xlu0 %786
      %788 = vrot.lane.b32.xlu0 %v389, 3
      %v789 = vpop.permute.xlu0 %788
      %vm790 = vcmp.lt.s32.totalorder %v396, 3
      %v791 = vsel %vm790, %v787, %v789
      %v792 = vsel %vm790, %v789, %v787
      %793 = vrot.lane.b32.xlu0 %v388, 125
      %v794 = vpop.permute.xlu0 %793
      %795 = vrot.lane.b32.xlu0 %v389, 125
      %v796 = vpop.permute.xlu0 %795
      %vm797 = vcmp.lt.s32.totalorder %v396, 125
      %v798 = vsel %vm797, %v794, %v796
      %v799 = vsel %vm797, %v796, %v794
      %800 = vrot.lane.b32.xlu0 %v388, 83
      %v801 = vpop.permute.xlu0 %800
      %802 = vrot.lane.b32.xlu0 %v389, 83
      %v803 = vpop.permute.xlu0 %802
      %vm804 = vcmp.lt.s32.totalorder %v396, 83
      %v805 = vsel %vm804, %v801, %v803
      %v806 = vsel %vm804, %v803, %v801
      %807 = vrot.lane.b32.xlu0 %v388, 80
      %v808 = vpop.permute.xlu0 %807
      %809 = vrot.lane.b32.xlu0 %v389, 80
      %v810 = vpop.permute.xlu0 %809
      %vm811 = vcmp.lt.s32.totalorder %v396, 80
      %v812 = vsel %vm811, %v808, %v810
      %v813 = vsel %vm811, %v810, %v808
      %814 = vrot.lane.b32.xlu0 %v388, 77
      %v815 = vpop.permute.xlu0 %814
      %816 = vrot.lane.b32.xlu0 %v389, 77
      %v817 = vpop.permute.xlu0 %816
      %vm818 = vcmp.lt.s32.totalorder %v396, 77
      %v819 = vsel %vm818, %v815, %v817
      %v820 = vsel %vm818, %v817, %v815
      %v821 = vld [vmem:[%s8] sm:$0xff]
      %v822 = vld [vmem:[%s8 + $0x8] sm:$0xff]
      %v823 = vld [vmem:[%s8 + $0x10] sm:$0xff]
      %v824 = vld [vmem:[%s8 + $0x18] sm:$0xff]
      %v825 = vld [vmem:[%s8 + $0x20] sm:$0xff]
      %v826 = vld [vmem:[%s8 + $0x28] sm:$0xff]
      %v827 = vld [vmem:[%s8 + $0x30] sm:$0xff]
      %v828 = vld [vmem:[%s8 + $0x38] sm:$0xff]
      %v829 = vld [vmem:[%s8 + $0x40] sm:$0xff]
      %v830 = vld [vmem:[%s8 + $0x48] sm:$0xff]
      %v831 = vld [vmem:[%s8 + $0x50] sm:$0xff]
      %v832 = vld [vmem:[%s8 + $0x58] sm:$0xff]
      %v833 = vld [vmem:[%s8 + $0x60] sm:$0xff]
      %v834 = vld [vmem:[%s8 + $0x68] sm:$0xff]
      %v835 = vld [vmem:[%s8 + $0x70] sm:$0xff]
      %v836 = vld [vmem:[%s8 + $0x78] sm:$0xff]
      %v837 = vld [vmem:[%s8 + $0x80] sm:$0xff]
      %v838 = vld [vmem:[%s8 + $0x88] sm:$0xff]
      %v839 = vmul.f32 %v771, %v821
      %v840 = vmul.f32 %v770, %v822
      %v841 = vmul.f32 %v778, %v823
      %v842 = vmul.f32 %v777, %v824
      %v843 = vmul.f32 %v785, %v825
      %v844 = vmul.f32 %v784, %v826
      %v845 = vmul.f32 %v792, %v827
      %v846 = vmul.f32 %v791, %v828
      %v847 = vmul.f32 %v388, %v829
      %v848 = vmul.f32 %v389, %v830
      %v849 = vmul.f32 %v798, %v831
      %v850 = vmul.f32 %v799, %v832
      %v851 = vmul.f32 %v805, %v833
      %v852 = vmul.f32 %v806, %v834
      %v853 = vmul.f32 %v812, %v835
      %v854 = vmul.f32 %v813, %v836
      %v855 = vmul.f32 %v819, %v837
      %v856 = vmul.f32 %v820, %v838
      %v857 = vld [vmem:[%s3] sm:$0xff]
      %v858 = vld [vmem:[%s4] sm:$0xff]
      %860 = vset.pattern.permute.xlu0 0
      %861 = vperm.xlu0 %860, %v858
      %v862 = vpop.permute.xlu0 %861
      %v865 = vsel %vm677, %v857, 0
      %867 = vmatprep.subr.mxu0 %v840
      %868 = vmatpush1.msra.mxu0 %v839
      %869 = vmatprep.subr.mxu0 %v842
      %870 = vmatpush1.msra.mxu0 %v841
      %871 = vmatprep.subr.mxu0 %v844
      %872 = vmatpush1.msra.mxu0 %v843
      %873 = vmatprep.subr.mxu0 %v846
      %874 = vmatpush1.msra.mxu0 %v845
      %875 = vmatprep.subr.mxu0 %v848
      %876 = vmatpush1.msra.mxu0 %v847
      %877 = vmatprep.subr.mxu0 %v850
      %878 = vmatpush1.msra.mxu0 %v849
      %879 = vmatprep.subr.mxu0 %v852
      %880 = vmatpush1.msra.mxu0 %v851
      %881 = vmatprep.subr.mxu0 %v854
      %882 = vmatpush1.msra.mxu0 %v853
      %883 = vmatprep.subr.mxu0 %v856
      %884 = vmatpush1.msra.mxu0 %v855
      %885 = vmatprep.subr.mxu0 0.0
      %886 = vmatpush1.msra.mxu0 0.0
      %887 = vmatprep.subr.mxu0 0.0
      %888 = vmatpush1.msra.mxu0 0.0
      %889 = vmatprep.subr.mxu0 0.0
      %890 = vmatpush1.msra.mxu0 0.0
      %891 = vmatprep.subr.mxu0 0.0
      %892 = vmatpush1.msra.mxu0 0.0
      %893 = vmatprep.subr.mxu0 0.0
      %894 = vmatpush1.msra.mxu0 0.0
      %895 = vmatprep.subr.mxu0 0.0
      %896 = vmatpush1.msra.mxu0 0.0
      %897 = vmatprep.subr.mxu0 0.0
      %898 = vmatpush1.msra.mxu0 0.0
      %899 = vmatprep.subr.mxu0 0.0
      %900 = vmatpush1.msra.mxu0 0.0
      %901 = vmatprep.subr.mxu0 0.0
      %902 = vmatpush1.msra.mxu0 0.0
      %903 = vmatprep.subr.mxu0 0.0
      %904 = vmatpush1.msra.mxu0 0.0
      %905 = vmatprep.subr.mxu0 0.0
      %906 = vmatpush1.msra.mxu0 0.0
      %907 = vmatprep.subr.mxu0 0.0
      %908 = vmatpush1.msra.mxu0 0.0
      %909 = vmatprep.subr.mxu0 0.0
      %910 = vmatpush1.msra.mxu0 0.0
      %911 = vmatprep.subr.mxu0 0.0
      %912 = vmatpush1.msra.mxu0 0.0
      %913 = vmatprep.subr.mxu0 0.0
      %914 = vmatpush1.msra.mxu0 0.0
      %915 = vmatprep.subr.mxu0 0.0
      %916 = vmatpush1.msra.mxu0 0.0
      %917 = vmatprep.subr.mxu0 0.0
      %918 = vmatpush1.msra.mxu0 0.0
      %919 = vmatprep.subr.mxu0 0.0
      %920 = vmatpush1.msra.mxu0 0.0
      %921 = vmatprep.subr.mxu0 0.0
      %922 = vmatpush1.msra.mxu0 0.0
      %923 = vmatprep.subr.mxu0 0.0
      %924 = vmatpush1.msra.mxu0 0.0
      %925 = vmatprep.subr.mxu0 0.0
      %926 = vmatpush1.msra.mxu0 0.0
      %927 = vmatprep.subr.mxu0 0.0
      %928 = vmatpush1.msra.mxu0 0.0
      %929 = vmatprep.subr.mxu0 0.0
      %930 = vmatpush1.msra.mxu0 0.0
      %931 = vmatprep.mubr.f32.mxu0 0.0
      %932 = vmatmul.mubr.f32.gmra.mrb[0].mxu0 %v865
      %v933 = vpop.f32.mrb[0].mxu0
      %v934 = vadd.f32 %v862, %v933
      %v935 = vpop.f32.mrb[0].mxu0
      %v936 = vadd.f32 %v862, %v935
      %937 = vdwg.mxu0
      %vm938 = vcmp.gt.f32.partialorder %v934, 0.0
      %vm939 = vcmp.gt.f32.partialorder %v936, 0.0
      %v940 = vstv %s390
      %v941 = vmul.f32 %v940, %v934
      %v942 = vmul.f32 %v940, %v936
      %v943 = vsel %vm938, %v934, %v941
      %v944 = vsel %vm939, %v936, %v942
      %945 = vrot.lane.b32.xlu0 %v761, 17
      %v946 = vpop.permute.xlu0 %945
      %947 = vrot.lane.b32.xlu0 %v763, 17
      %v948 = vpop.permute.xlu0 %947
      %949 = vrot.lane.b32.xlu0 %v943, 17
      %v950 = vpop.permute.xlu0 %949
      %951 = vrot.lane.b32.xlu0 %v762, 17
      %v952 = vpop.permute.xlu0 %951
      %953 = vrot.lane.b32.xlu0 %v764, 17
      %v954 = vpop.permute.xlu0 %953
      %955 = vrot.lane.b32.xlu0 %v944, 17
      %v956 = vpop.permute.xlu0 %955
      %v957 = vsel %vm439, %v946, %v952
      %v958 = vsel %vm439, %v948, %v954
      %v959 = vsel %vm439, %v950, %v956
      %v960 = vsel %vm439, %v952, %v946
      %v961 = vsel %vm439, %v954, %v948
      %v962 = vsel %vm439, %v956, %v950
      %963 = vrot.lane.b32.xlu0 %v761, 16
      %v964 = vpop.permute.xlu0 %963
      %965 = vrot.lane.b32.xlu0 %v763, 16
      %v966 = vpop.permute.xlu0 %965
      %967 = vrot.lane.b32.xlu0 %v943, 16
      %v968 = vpop.permute.xlu0 %967
      %969 = vrot.lane.b32.xlu0 %v762, 16
      %v970 = vpop.permute.xlu0 %969
      %971 = vrot.lane.b32.xlu0 %v764, 16
      %v972 = vpop.permute.xlu0 %971
      %973 = vrot.lane.b32.xlu0 %v944, 16
      %v974 = vpop.permute.xlu0 %973
      %v975 = vsel %vm446, %v964, %v970
      %v976 = vsel %vm446, %v966, %v972
      %v977 = vsel %vm446, %v968, %v974
      %v978 = vsel %vm446, %v970, %v964
      %v979 = vsel %vm446, %v972, %v966
      %v980 = vsel %vm446, %v974, %v968
      %981 = vrot.lane.b32.xlu0 %v761, 15
      %v982 = vpop.permute.xlu0 %981
      %983 = vrot.lane.b32.xlu0 %v763, 15
      %v984 = vpop.permute.xlu0 %983
      %985 = vrot.lane.b32.xlu0 %v943, 15
      %v986 = vpop.permute.xlu0 %985
      %987 = vrot.lane.b32.xlu0 %v762, 15
      %v988 = vpop.permute.xlu0 %987
      %989 = vrot.lane.b32.xlu0 %v764, 15
      %v990 = vpop.permute.xlu0 %989
      %991 = vrot.lane.b32.xlu0 %v944, 15
      %v992 = vpop.permute.xlu0 %991
      %v993 = vsel %vm453, %v982, %v988
      %v994 = vsel %vm453, %v984, %v990
      %v995 = vsel %vm453, %v986, %v992
      %v996 = vsel %vm453, %v988, %v982
      %v997 = vsel %vm453, %v990, %v984
      %v998 = vsel %vm453, %v992, %v986
      %999 = vrot.lane.b32.xlu0 %v761, 1
      %v1000 = vpop.permute.xlu0 %999
      %1001 = vrot.lane.b32.xlu0 %v763, 1
      %v1002 = vpop.permute.xlu0 %1001
      %1003 = vrot.lane.b32.xlu0 %v943, 1
      %v1004 = vpop.permute.xlu0 %1003
      %1005 = vrot.lane.b32.xlu0 %v762, 1
      %v1006 = vpop.permute.xlu0 %1005
      %1007 = vrot.lane.b32.xlu0 %v764, 1
      %v1008 = vpop.permute.xlu0 %1007
      %1009 = vrot.lane.b32.xlu0 %v944, 1
      %v1010 = vpop.permute.xlu0 %1009
      %v1011 = vsel %vm474, %v1000, %v1006
      %v1012 = vsel %vm474, %v1002, %v1008
      %v1013 = vsel %vm474, %v1004, %v1010
      %v1014 = vsel %vm474, %v1006, %v1000
      %v1015 = vsel %vm474, %v1008, %v1002
      %v1016 = vsel %vm474, %v1010, %v1004
      %1017 = vrot.lane.b32.xlu0 %v761, 127
      %v1018 = vpop.permute.xlu0 %1017
      %1019 = vrot.lane.b32.xlu0 %v763, 127
      %v1020 = vpop.permute.xlu0 %1019
      %1021 = vrot.lane.b32.xlu0 %v943, 127
      %v1022 = vpop.permute.xlu0 %1021
      %1023 = vrot.lane.b32.xlu0 %v762, 127
      %v1024 = vpop.permute.xlu0 %1023
      %1025 = vrot.lane.b32.xlu0 %v764, 127
      %v1026 = vpop.permute.xlu0 %1025
      %1027 = vrot.lane.b32.xlu0 %v944, 127
      %v1028 = vpop.permute.xlu0 %1027
      %v1029 = vsel %vm481, %v1018, %v1024
      %v1030 = vsel %vm481, %v1020, %v1026
      %v1031 = vsel %vm481, %v1022, %v1028
      %v1032 = vsel %vm481, %v1024, %v1018
      %v1033 = vsel %vm481, %v1026, %v1020
      %v1034 = vsel %vm481, %v1028, %v1022
      %1035 = vrot.lane.b32.xlu0 %v761, 113
      %v1036 = vpop.permute.xlu0 %1035
      %1037 = vrot.lane.b32.xlu0 %v763, 113
      %v1038 = vpop.permute.xlu0 %1037
      %1039 = vrot.lane.b32.xlu0 %v943, 113
      %v1040 = vpop.permute.xlu0 %1039
      %1041 = vrot.lane.b32.xlu0 %v762, 113
      %v1042 = vpop.permute.xlu0 %1041
      %1043 = vrot.lane.b32.xlu0 %v764, 113
      %v1044 = vpop.permute.xlu0 %1043
      %1045 = vrot.lane.b32.xlu0 %v944, 113
      %v1046 = vpop.permute.xlu0 %1045
      %v1047 = vsel %vm502, %v1036, %v1042
      %v1048 = vsel %vm502, %v1038, %v1044
      %v1049 = vsel %vm502, %v1040, %v1046
      %v1050 = vsel %vm502, %v1042, %v1036
      %v1051 = vsel %vm502, %v1044, %v1038
      %v1052 = vsel %vm502, %v1046, %v1040
      %1053 = vrot.lane.b32.xlu0 %v761, 112
      %v1054 = vpop.permute.xlu0 %1053
      %1055 = vrot.lane.b32.xlu0 %v763, 112
      %v1056 = vpop.permute.xlu0 %1055
      %1057 = vrot.lane.b32.xlu0 %v943, 112
      %v1058 = vpop.permute.xlu0 %1057
      %1059 = vrot.lane.b32.xlu0 %v762, 112
      %v1060 = vpop.permute.xlu0 %1059
      %1061 = vrot.lane.b32.xlu0 %v764, 112
      %v1062 = vpop.permute.xlu0 %1061
      %1063 = vrot.lane.b32.xlu0 %v944, 112
      %v1064 = vpop.permute.xlu0 %1063
      %v1065 = vsel %vm509, %v1054, %v1060
      %v1066 = vsel %vm509, %v1056, %v1062
      %v1067 = vsel %vm509, %v1058, %v1064
      %v1068 = vsel %vm509, %v1060, %v1054
      %v1069 = vsel %vm509, %v1062, %v1056
      %v1070 = vsel %vm509, %v1064, %v1058
      %1071 = vrot.lane.b32.xlu0 %v761, 111
      %v1072 = vpop.permute.xlu0 %1071
      %1073 = vrot.lane.b32.xlu0 %v763, 111
      %v1074 = vpop.permute.xlu0 %1073
      %1075 = vrot.lane.b32.xlu0 %v943, 111
      %v1076 = vpop.permute.xlu0 %1075
      %1077 = vrot.lane.b32.xlu0 %v762, 111
      %v1078 = vpop.permute.xlu0 %1077
      %1079 = vrot.lane.b32.xlu0 %v764, 111
      %v1080 = vpop.permute.xlu0 %1079
      %1081 = vrot.lane.b32.xlu0 %v944, 111
      %v1082 = vpop.permute.xlu0 %1081
      %v1083 = vsel %vm516, %v1072, %v1078
      %v1084 = vsel %vm516, %v1074, %v1080
      %v1085 = vsel %vm516, %v1076, %v1082
      %v1086 = vsel %vm516, %v1078, %v1072
      %v1087 = vsel %vm516, %v1080, %v1074
      %v1088 = vsel %vm516, %v1082, %v1076
      %v1089 = vld [vmem:[%s9] sm:$0xff]
      %v1090 = vld [vmem:[%s9 + $0x8] sm:$0xff]
      %v1091 = vld [vmem:[%s9 + $0x10] sm:$0xff]
      %v1092 = vld [vmem:[%s9 + $0x18] sm:$0xff]
      %v1093 = vld [vmem:[%s9 + $0x20] sm:$0xff]
      %v1094 = vld [vmem:[%s9 + $0x28] sm:$0xff]
      %v1095 = vld [vmem:[%s9 + $0x30] sm:$0xff]
      %v1096 = vld [vmem:[%s9 + $0x38] sm:$0xff]
      %v1097 = vld [vmem:[%s9 + $0x40] sm:$0xff]
      %v1098 = vld [vmem:[%s9 + $0x48] sm:$0xff]
      %v1099 = vld [vmem:[%s9 + $0x50] sm:$0xff]
      %v1100 = vld [vmem:[%s9 + $0x58] sm:$0xff]
      %v1101 = vld [vmem:[%s9 + $0x60] sm:$0xff]
      %v1102 = vld [vmem:[%s9 + $0x68] sm:$0xff]
      %v1103 = vld [vmem:[%s9 + $0x70] sm:$0xff]
      %v1104 = vld [vmem:[%s9 + $0x78] sm:$0xff]
      %v1105 = vld [vmem:[%s9 + $0x80] sm:$0xff]
      %v1106 = vld [vmem:[%s9 + $0x88] sm:$0xff]
      %v1107 = vld [vmem:[%s9 + $0x90] sm:$0xff]
      %v1108 = vld [vmem:[%s9 + $0x98] sm:$0xff]
      %v1109 = vld [vmem:[%s9 + $0xa0] sm:$0xff]
      %v1110 = vld [vmem:[%s9 + $0xa8] sm:$0xff]
      %v1111 = vld [vmem:[%s9 + $0xb0] sm:$0xff]
      %v1112 = vld [vmem:[%s9 + $0xb8] sm:$0xff]
      %v1113 = vld [vmem:[%s9 + $0xc0] sm:$0xff]
      %v1114 = vld [vmem:[%s9 + $0xc8] sm:$0xff]
      %v1115 = vld [vmem:[%s9 + $0xd0] sm:$0xff]
      %v1116 = vld [vmem:[%s9 + $0xd8] sm:$0xff]
      %v1117 = vld [vmem:[%s9 + $0xe0] sm:$0xff]
      %v1118 = vld [vmem:[%s9 + $0xe8] sm:$0xff]
      %v1119 = vld [vmem:[%s9 + $0xf0] sm:$0xff]
      %v1120 = vld [vmem:[%s9 + $0xf8] sm:$0xff]
      %v1121 = vld [vmem:[%s9 + $0x100] sm:$0xff]
      %v1122 = vld [vmem:[%s9 + $0x108] sm:$0xff]
      %v1123 = vld [vmem:[%s9 + $0x110] sm:$0xff]
      %v1124 = vld [vmem:[%s9 + $0x118] sm:$0xff]
      %v1125 = vld [vmem:[%s9 + $0x120] sm:$0xff]
      %v1126 = vld [vmem:[%s9 + $0x128] sm:$0xff]
      %v1127 = vld [vmem:[%s9 + $0x130] sm:$0xff]
      %v1128 = vld [vmem:[%s9 + $0x138] sm:$0xff]
      %v1129 = vld [vmem:[%s9 + $0x140] sm:$0xff]
      %v1130 = vld [vmem:[%s9 + $0x148] sm:$0xff]
      %v1131 = vld [vmem:[%s9 + $0x150] sm:$0xff]
      %v1132 = vld [vmem:[%s9 + $0x158] sm:$0xff]
      %v1133 = vld [vmem:[%s9 + $0x160] sm:$0xff]
      %v1134 = vld [vmem:[%s9 + $0x168] sm:$0xff]
      %v1135 = vld [vmem:[%s9 + $0x170] sm:$0xff]
      %v1136 = vld [vmem:[%s9 + $0x178] sm:$0xff]
      %v1137 = vld [vmem:[%s9 + $0x180] sm:$0xff]
      %v1138 = vld [vmem:[%s9 + $0x188] sm:$0xff]
      %v1139 = vld [vmem:[%s9 + $0x190] sm:$0xff]
      %v1140 = vld [vmem:[%s9 + $0x198] sm:$0xff]
      %v1141 = vld [vmem:[%s9 + $0x1a0] sm:$0xff]
      %v1142 = vld [vmem:[%s9 + $0x1a8] sm:$0xff]
      %v1143 = vmul.f32 %v960, %v1089
      %v1144 = vmul.f32 %v957, %v1090
      %v1145 = vmul.f32 %v961, %v1091
      %v1146 = vmul.f32 %v958, %v1092
      %v1147 = vmul.f32 %v962, %v1093
      %v1148 = vmul.f32 %v959, %v1094
      %v1149 = vmul.f32 %v978, %v1095
      %v1150 = vmul.f32 %v975, %v1096
      %v1151 = vmul.f32 %v979, %v1097
      %v1152 = vmul.f32 %v976, %v1098
      %v1153 = vmul.f32 %v980, %v1099
      %v1154 = vmul.f32 %v977, %v1100
      %v1155 = vmul.f32 %v996, %v1101
      %v1156 = vmul.f32 %v993, %v1102
      %v1157 = vmul.f32 %v997, %v1103
      %v1158 = vmul.f32 %v994, %v1104
      %v1159 = vmul.f32 %v998, %v1105
      %v1160 = vmul.f32 %v995, %v1106
      %v1161 = vmul.f32 %v1014, %v1107
      %v1162 = vmul.f32 %v1011, %v1108
      %v1163 = vmul.f32 %v1015, %v1109
      %v1164 = vmul.f32 %v1012, %v1110
      %v1165 = vmul.f32 %v1016, %v1111
      %v1166 = vmul.f32 %v1013, %v1112
      %v1167 = vmul.f32 %v761, %v1113
      %v1168 = vmul.f32 %v762, %v1114
      %v1169 = vmul.f32 %v763, %v1115
      %v1170 = vmul.f32 %v764, %v1116
      %v1171 = vmul.f32 %v943, %v1117
      %v1172 = vmul.f32 %v944, %v1118
      %v1173 = vmul.f32 %v1029, %v1119
      %v1174 = vmul.f32 %v1032, %v1120
      %v1175 = vmul.f32 %v1030, %v1121
      %v1176 = vmul.f32 %v1033, %v1122
      %v1177 = vmul.f32 %v1031, %v1123
      %v1178 = vmul.f32 %v1034, %v1124
      %v1179 = vmul.f32 %v1047, %v1125
      %v1180 = vmul.f32 %v1050, %v1126
      %v1181 = vmul.f32 %v1048, %v1127
      %v1182 = vmul.f32 %v1051, %v1128
      %v1183 = vmul.f32 %v1049, %v1129
      %v1184 = vmul.f32 %v1052, %v1130
      %v1185 = vmul.f32 %v1065, %v1131
      %v1186 = vmul.f32 %v1068, %v1132
      %v1187 = vmul.f32 %v1066, %v1133
      %v1188 = vmul.f32 %v1069, %v1134
      %v1189 = vmul.f32 %v1067, %v1135
      %v1190 = vmul.f32 %v1070, %v1136
      %v1191 = vmul.f32 %v1083, %v1137
      %v1192 = vmul.f32 %v1086, %v1138
      %v1193 = vmul.f32 %v1084, %v1139
      %v1194 = vmul.f32 %v1087, %v1140
      %v1195 = vmul.f32 %v1085, %v1141
      %v1196 = vmul.f32 %v1088, %v1142
      %v1197 = vld [vmem:[%s5] sm:$0xff]
      %v1198 = vld [vmem:[%s5 + $0x8] sm:$0xff]
      %v1199 = vld [vmem:[%s6] sm:$0xff]
      %1201 = vset.pattern.permute.xlu0 0
      %1202 = vperm.xlu0 %1201, %v1199
      %v1203 = vpop.permute.xlu0 %1202
      %vm1205 = vcmask 719872
      %v1207 = vsel %vm1205, %v1198, 0
      %1209 = vmatprep.subr.mxu0 %v1144
      %1210 = vmatpush1.msra.mxu0 %v1143
      %1211 = vmatprep.subr.mxu0 %v1146
      %1212 = vmatpush1.msra.mxu0 %v1145
      %1213 = vmatprep.subr.mxu0 %v1148
      %1214 = vmatpush1.msra.mxu0 %v1147
      %1215 = vmatprep.subr.mxu0 %v1150
      %1216 = vmatpush1.msra.mxu0 %v1149
      %1217 = vmatprep.subr.mxu0 %v1152
      %1218 = vmatpush1.msra.mxu0 %v1151
      %1219 = vmatprep.subr.mxu0 %v1154
      %1220 = vmatpush1.msra.mxu0 %v1153
      %1221 = vmatprep.subr.mxu0 %v1156
      %1222 = vmatpush1.msra.mxu0 %v1155
      %1223 = vmatprep.subr.mxu0 %v1158
      %1224 = vmatpush1.msra.mxu0 %v1157
      %1225 = vmatprep.subr.mxu0 %v1160
      %1226 = vmatpush1.msra.mxu0 %v1159
      %1227 = vmatprep.subr.mxu0 %v1162
      %1228 = vmatpush1.msra.mxu0 %v1161
      %1229 = vmatprep.subr.mxu0 %v1164
      %1230 = vmatpush1.msra.mxu0 %v1163
      %1231 = vmatprep.subr.mxu0 %v1166
      %1232 = vmatpush1.msra.mxu0 %v1165
      %1233 = vmatprep.subr.mxu0 %v1168
      %1234 = vmatpush1.msra.mxu0 %v1167
      %1235 = vmatprep.subr.mxu0 %v1170
      %1236 = vmatpush1.msra.mxu0 %v1169
      %1237 = vmatprep.subr.mxu0 %v1172
      %1238 = vmatpush1.msra.mxu0 %v1171
      %1239 = vmatprep.subr.mxu0 %v1174
      %1240 = vmatpush1.msra.mxu0 %v1173
      %1241 = vmatprep.subr.mxu0 %v1176
      %1242 = vmatpush1.msra.mxu0 %v1175
      %1243 = vmatprep.subr.mxu0 %v1178
      %1244 = vmatpush1.msra.mxu0 %v1177
      %1245 = vmatprep.subr.mxu0 %v1180
      %1246 = vmatpush1.msra.mxu0 %v1179
      %1247 = vmatprep.subr.mxu0 %v1182
      %1248 = vmatpush1.msra.mxu0 %v1181
      %1249 = vmatprep.subr.mxu0 %v1184
      %1250 = vmatpush1.msra.mxu0 %v1183
      %1251 = vmatprep.subr.mxu0 %v1186
      %1252 = vmatpush1.msra.mxu0 %v1185
      %1253 = vmatprep.subr.mxu0 %v1188
      %1254 = vmatpush1.msra.mxu0 %v1187
      %1255 = vmatprep.subr.mxu0 %v1190
      %1256 = vmatpush1.msra.mxu0 %v1189
      %1257 = vmatprep.subr.mxu0 %v1192
      %1258 = vmatpush1.msra.mxu0 %v1191
      %1259 = vmatprep.subr.mxu0 %v1194
      %1260 = vmatpush1.msra.mxu0 %v1193
      %1261 = vmatprep.subr.mxu0 %v1196
      %1262 = vmatpush1.msra.mxu0 %v1195
      %1263 = vmatprep.subr.mxu0 0.0
      %1264 = vmatpush1.msra.mxu0 0.0
      %1265 = vmatprep.subr.mxu0 0.0
      %1266 = vmatpush1.msra.mxu0 0.0
      %1267 = vmatprep.subr.mxu0 0.0
      %1268 = vmatpush1.msra.mxu0 0.0
      %1269 = vmatprep.subr.mxu0 0.0
      %1270 = vmatpush1.msra.mxu0 0.0
      %1271 = vmatprep.subr.mxu0 0.0
      %1272 = vmatpush1.msra.mxu0 0.0
      %1273 = vmatprep.mubr.f32.mxu0 %v1207
      %1274 = vmatmul.mubr.f32.gmra.mrb[0].mxu0 %v1197
      %v1275 = vpop.f32.mrb[0].mxu0
      %v1276 = vadd.f32 %v1203, %v1275
      %v1277 = vpop.f32.mrb[0].mxu0
      %v1278 = vadd.f32 %v1203, %v1277
      %1279 = vdwg.mxu0
      %v1280 = vadd.f32 %v1276, %v388
      %v1281 = vadd.f32 %v1278, %v389
      %v1282 = vmax.f32 %v1280, 0.0
      %v1283 = vmax.f32 %v1281, 0.0
      %1284 = vst [vmem:[%s387] sm:$0xff] %v1282
      %1285 = vst [vmem:[%s387 + $0x8] sm:$0xff] %v1283
      %p1286 = scmp.lt.s32.totalorder %s23, 1
      %s1287 = scalar_select %p1286, %s23, 1
      %s1288 = smul.addr %s1287, 2
      %s1289 = smul.addr %s1288, 8
      %s1290 = scalar_lea.vmem %s11, %s1289
      // Predicated region
      $region65: #{mse_forward.1} parent=63 // pred_check
        %p1291 = pneg %p277
      $region66: #{mse_forward.1} parent=63 // pred_check_branch
        %1293 = sbr.rel (%p1291) target = $region68
      $region67: #{mse_forward.1} parent=63 // pred_region
        _
      $region68: #{mse_forward.1} parent=63 // pred_fallthru
        _
    $region64: #{mse_forward.1} parent=5 // pred_fallthru
      _
    %p1294 = scmp.le.s32.totalorder 2, %s18
    // Predicated region
    $region69: #{mse_forward.1} parent=5 // pred_check
      %p1295 = pneg %p1294
    $region70: #{mse_forward.1} parent=5 // pred_check_branch
      %1297 = sbr.rel (%p1295) target = $region72
    $region71: #{mse_forward.1} parent=5 // pred_region
      %s1298 = ssub.s32 %s18, 2
      // Predicated region
      $region73: #{mse_forward.1} parent=71 // pred_check
        %p1299 = pneg %p283
      $region74: #{mse_forward.1} parent=71 // pred_check_branch
        %1301 = sbr.rel (%p1299) target = $region76
      $region75: #{mse_forward.1} parent=71 // pred_region
        %p1302 = scmp.lt.s32.totalorder %s24, 1
        %s1303 = scalar_select %p1302, %s24, 1
        %s1304 = smul.addr %s1303, 2
        %s1305 = smul.addr %s1304, 8
        %s1306 = scalar_lea.vmem %s11, %s1305
      $region76: #{mse_forward.1} parent=71 // pred_fallthru
        _
    $region72: #{mse_forward.1} parent=5 // pred_fallthru
      _
  $region6: #{mse_forward.1} parent=0 // loop_footer
    %s22 = sadd.s32 1, %s18
  $region7: #{mse_forward.1} parent=0 // loop_footer_branch
    %17 = sbr.rel target = $region3
  $region8: #{mse_forward.1} parent=0 // loop_exit
    _

</llo_original>
